<compile_context>
chip_gen: v5e
topology: v5e:2x2
jax: 0.10.0
libtpu: 0.0.40
codegen_flags: <defaults>
</compile_context>

<pallas_src>
import math
import functools

import jax
import jax.numpy as jnp
from jax.experimental import pallas as pl
from jax.experimental.pallas import tpu as pltpu

EPS = 1e-5  # PyTorch nn.LayerNorm default


# ---------------------------------------------------------------------------
# Fused transformer kernel: grid = (batch_blocks, layers)
# ---------------------------------------------------------------------------
def fused_transformer_kernel(x_ref, g_ref, be_ref, wqkv_ref, bqkv_ref,
                             wout_ref, bout_ref, fg_ref, fb_ref,
                             out_ref, q_ref, k_ref, v_ref,
                             *, heads, head_size, seq_len, block_b,
                             compute_dtype):
    H, Hs = heads, head_size
    N, Bt = seq_len, block_b
    M, C = x_ref.shape                       # M = Bt * N rows, C lanes
    cd = compute_dtype

    layer = pl.program_id(1)
    n_layers = pl.num_programs(1)

    # Layer 0: seed the resident activation.  out_ref's block index is constant
    # across the layer axis, so it stays in VMEM and is written back to HBM
    # only after the last layer for this batch block.
    @pl.when(layer == 0)
    def _():
        out_ref[...] = x_ref[...]

    x = out_ref[...]                         # (M, C) f32

    # --- LayerNorm (biased variance, eps = 1e-5) ---------------------------
    mu = jnp.mean(x, axis=-1, keepdims=True)
    var = jnp.mean((x - mu) ** 2, axis=-1, keepdims=True)
    xn = (x - mu) * jax.lax.rsqrt(var + EPS) * g_ref[0] + be_ref[0]

    # --- fused qkv projection: one (M, C) @ (C, 3C) MXU matmul --------------
    # (columns pre-packed head-major [q | k | v]; q columns pre-scaled by
    #  1/sqrt(Hs) on the host)
    qkv = jnp.dot(xn.astype(cd), wqkv_ref[0],
                  preferred_element_type=jnp.float32) + bqkv_ref[0]
    q2 = qkv[:, 0 * C:1 * C]                 # (M, C), lane-dense (head, dim)
    k2 = qkv[:, 1 * C:2 * C]
    v2 = qkv[:, 2 * C:3 * C]

    # --- head-batched attention ---------------------------------------------
    def to_heads(t):                         # (M, C) -> (H*Bt, N, Hs)
        th = jnp.stack([t[:, h * Hs:(h + 1) * Hs] for h in range(H)], axis=0)
        th = th.reshape(H, Bt, N, Hs)        # tile-aligned sublane split
        return th.reshape(H * Bt, N, Hs)     # leading-dim merge

    qh, kh, vh = to_heads(q2), to_heads(k2), to_heads(v2)

    s = jnp.einsum('gqd,gkd->gqk', qh.astype(cd), kh.astype(cd),
                   preferred_element_type=jnp.float32)     # (H*Bt, N, N)
    s = s - jnp.max(s, axis=-1, keepdims=True)
    p = jnp.exp(s)
    p = p * pl.reciprocal(jnp.sum(p, axis=-1, keepdims=True), approx=True)
    # Dropout(p=0.3) == identity (eval mode).

    o = jnp.einsum('gqk,gkd->gqd', p.astype(cd), vh.astype(cd),
                   preferred_element_type=jnp.float32)     # (H*Bt, N, Hs)

    # merge heads back lane-dense: (H*Bt, N, Hs) -> (M, C)
    o = o.reshape(H, Bt, N, Hs).reshape(H, M, Hs)
    o = jnp.concatenate([o[h] for h in range(H)], axis=1)  # (M, C)

    # --- output projection (full-K MXU matmul) + residual -------------------
    y = jnp.dot(o.astype(cd), wout_ref[0],
                preferred_element_type=jnp.float32) + bout_ref[0]
    y = x + y

    @pl.when(layer < n_layers - 1)
    def _():
        out_ref[...] = y                     # stays resident in VMEM

    @pl.when(layer == n_layers - 1)
    def _():
        # fused final LayerNorm
        fm = jnp.mean(y, axis=-1, keepdims=True)
        fv = jnp.mean((y - fm) ** 2, axis=-1, keepdims=True)
        out_ref[...] = (y - fm) * jax.lax.rsqrt(fv + EPS) * fg_ref[...] + fb_ref[...]
        # lane-dense q/k/v emission (PyTorch head split done outside in XLA);
        # q was computed with the folded 1/sqrt(Hs) -> undo it once here.
        q_ref[...] = q2 * math.sqrt(Hs)
        k_ref[...] = k2
        v_ref[...] = v2


# ---------------------------------------------------------------------------
# Generation-aware block picking / VMEM budgeting
# ---------------------------------------------------------------------------
def _device_is_multi_tensorcore():
    try:
        kind = jax.devices()[0].device_kind.lower()
    except Exception:
        return False
    return any(t in kind for t in ("v7", "v5p", "v4"))


def _vmem_bytes_estimate(bt, N, C, H, w_itemsize):
    m = bt * N
    act = 5 * 2 * m * C * 4                                  # x + out + q/k/v (2-buf, f32)
    wts = 2 * ((3 * C * C + C * C) * w_itemsize + 6 * C * 4)  # streamed per-layer weights
    inter = 3 * m * 3 * C * 4 + 2 * H * bt * N * N * 4        # qkv / head copies / scores
    return act + wts + inter


def _pick_block_b(B, N, C, H, w_itemsize):
    multi_tc = _device_is_multi_tensorcore()
    budget = (10 if multi_tc else 24) * 1024 * 1024
    best = 1
    for d in range(1, B + 1):
        if B % d:
            continue
        if multi_tc and B >= 2 and B // d < 2:
            continue                          # keep both TensorCores busy
        if _vmem_bytes_estimate(d, N, C, H, w_itemsize) > budget:
            continue
        best = d
    return best


# ---------------------------------------------------------------------------
# Wrapper
# ---------------------------------------------------------------------------
def multi_attention_transformer(x, params, heads, head_size,
                                compute_dtype=jnp.bfloat16):
    """x: (B, N, C) f32 -> (out (B,N,C), q/k/v (B,H,N,Hs)); eval-mode forward."""
    B, N, C = x.shape
    H, Hs = heads, head_size
    L = params["w_qkv"].shape[0]
    assert L >= 1, "need at least one attention block"

    w_itemsize = jnp.dtype(compute_dtype).itemsize
    bt = _pick_block_b(B, N, C, H, w_itemsize)
    grid = (B // bt, L)
    M = bt * N

    # pre-cast matmul weights so their HBM->VMEM DMA matches the MXU-input path
    w_qkv = params["w_qkv"].astype(compute_dtype)
    w_out = params["w_out"].astype(compute_dtype)

    x2d = x.reshape(B * N, C)                # rows = (batch, token)

    def act_block():
        return pl.BlockSpec((M, C), lambda i, l: (i, 0))

    def lyr(shape):
        return pl.BlockSpec((1,) + shape, lambda i, l: (l, 0, 0))

    def fixed(shape):
        return pl.BlockSpec(shape, lambda i, l: (0, 0))

    in_specs = [
        act_block(),
        lyr((1, C)), lyr((1, C)),            # LayerNorm gamma / beta
        lyr((C, 3 * C)), lyr((1, 3 * C)),    # packed qkv W / b
        lyr((C, C)), lyr((1, C)),            # out-proj W / b
        fixed((1, C)), fixed((1, C)),        # final LayerNorm gamma / beta
    ]
    out_specs = tuple(act_block() for _ in range(4))
    out_shape = tuple(jax.ShapeDtypeStruct((B * N, C), jnp.float32)
                      for _ in range(4))

    cp = dict(dimension_semantics=("parallel", "arbitrary"))
    est = _vmem_bytes_estimate(bt, N, C, H, w_itemsize)
    if est > 12 * 1024 * 1024:               # only override the scoped default if needed
        cp["vmem_limit_bytes"] = int(min(est * 1.5, 96 * 1024 * 1024))

    kern = functools.partial(fused_transformer_kernel, heads=H, head_size=Hs,
                             seq_len=N, block_b=bt, compute_dtype=compute_dtype)

    out, q, k, v = pl.pallas_call(
        kern,
        out_shape=out_shape,
        grid=grid,
        in_specs=in_specs,
        out_specs=out_specs,
        compiler_params=pltpu.CompilerParams(**cp),
    )(x2d, params["ln_g"], params["ln_b"], w_qkv, params["b_qkv"],
      w_out, params["b_out"], params["final_g"], params["final_b"])

    def split(t):                            # (B*N, C) -> (B, H, N, Hs)
        return t.reshape(B, N, H, Hs).transpose(0, 2, 1, 3)

    return out.reshape(B, N, C), split(q), split(k), split(v)


# ---------------------------------------------------------------------------
# Deterministic parameter init (shapes per the PyTorch __init__)
# ---------------------------------------------------------------------------
def init_params(key, layers, embed, heads):
    C, H = embed, heads
    Hs = C // H
    bound = 1.0 / math.sqrt(C)
    scale = 1.0 / math.sqrt(Hs)

    ln_g, ln_b, wqkv, bqkv, wout, bout = [], [], [], [], [], []
    tq, tb, tw, tbo = [], [], [], []
    for _ in range(layers):
        key, k1, k2, k3, k4 = jax.random.split(key, 5)
        # torch nn.Linear layout (used by the exact reference): columns ordered
        # o = h*Hs*3 + d*3 + c, matching qkv.view(B,N,H,Hs,3).
        w_qkv_t = jax.random.uniform(k1, (C, 3 * C), jnp.float32, -bound, bound)
        b_qkv_t = jax.random.uniform(k2, (3 * C,), jnp.float32, -bound, bound)
        w_out = jax.random.uniform(k3, (C, C), jnp.float32, -bound, bound)
        b_out = jax.random.uniform(k4, (C,), jnp.float32, -bound, bound)
        tq.append(w_qkv_t); tb.append(b_qkv_t); tw.append(w_out); tbo.append(b_out)

        # kernel layout: columns repacked to [ q | k | v ], each head-major
        # (h, d); the 1/sqrt(Hs) score scale is folded into the q columns.
        wr = w_qkv_t.reshape(C, H, Hs, 3)
        br = b_qkv_t.reshape(H, Hs, 3)
        w_k = jnp.concatenate([wr[..., c].reshape(C, C) for c in range(3)], axis=1)
        b_k = jnp.concatenate([br[..., c].reshape(C) for c in range(3)])
        w_k = w_k.at[:, :C].multiply(scale)
        b_k = b_k.at[:C].multiply(scale)

        wqkv.append(w_k)
        bqkv.append(b_k.reshape(1, 3 * C))
        wout.append(w_out)
        bout.append(b_out.reshape(1, C))
        ln_g.append(jnp.ones((1, C), jnp.float32))
        ln_b.append(jnp.zeros((1, C), jnp.float32))

    return dict(
        ln_g=jnp.stack(ln_g), ln_b=jnp.stack(ln_b),
        w_qkv=jnp.stack(wqkv), b_qkv=jnp.stack(bqkv),
        w_out=jnp.stack(wout), b_out=jnp.stack(bout),
        final_g=jnp.ones((1, C), jnp.float32),
        final_b=jnp.zeros((1, C), jnp.float32),
        torch=dict(w_qkv=jnp.stack(tq), b_qkv=jnp.stack(tb),
                   w_out=jnp.stack(tw), b_out=jnp.stack(tbo)),
    )


# ---------------------------------------------------------------------------
# Pure-JAX reference implementing the exact PyTorch math & weight layout
# (validates the head-major column repack and the scale fold).
# ---------------------------------------------------------------------------
def _reference(x, params, heads, head_size):
    H, Hs = heads, head_size
    hp = jax.lax.Precision.HIGHEST
    tp = params["torch"]
    L = tp["w_qkv"].shape[0]

    def ln(t, g, b):
        m = jnp.mean(t, -1, keepdims=True)
        v = jnp.mean((t - m) ** 2, -1, keepdims=True)
        return (t - m) * jax.lax.rsqrt(v + EPS) * g + b

    q = k = v = None
    for li in range(L):
        B, N, C = x.shape
        xn = ln(x, params["ln_g"][li, 0], params["ln_b"][li, 0])
        qkv = jnp.einsum('bnc,cd->bnd', xn, tp["w_qkv"][li],
                         precision=hp) + tp["b_qkv"][li]
        qkv = qkv.reshape(B, N, H, Hs, 3).transpose(4, 0, 2, 1, 3)  # (3,B,H,N,Hs)
        q, k, v = qkv[0], qkv[1], qkv[2]
        s = jnp.einsum('bhqd,bhkd->bhqk', q, k, precision=hp) / math.sqrt(Hs)
        p = jax.nn.softmax(s, axis=-1)
        o = jnp.einsum('bhqk,bhkd->bhqd', p, v, precision=hp)
        o = o.transpose(0, 2, 1, 3).reshape(B, N, C)
        y = jnp.einsum('bnc,cd->bnd', o, tp["w_out"][li],
                       precision=hp) + tp["b_out"][li]
        x = x + y
    return ln(x, params["final_g"], params["final_b"]), q, k, v


# ---------------------------------------------------------------------------
if __name__ == "__main__":
    B, N, C, H = 2, 16, 32, 4          # batch, seq, embed_size, attention_heads
    Hs = C // H
    LAYERS = 2

    key = jax.random.PRNGKey(0)
    kx, kp = jax.random.split(key)
    x = jax.random.normal(kx, (B, N, C), jnp.float32)
    params = init_params(kp, LAYERS, C, H)

    # exact PyTorch-layout reference
    r_out, r_q, r_k, r_v = _reference(x, params, H, Hs)

    # f32 MXU-input path: PyTorch-close numerics
    out32, q32, k32, v32 = multi_attention_transformer(
        x, params, H, Hs, compute_dtype=jnp.float32)
    jax.block_until_ready((out32, q32, k32, v32))
    for a, b in ((out32, r_out), (q32, r_q), (k32, r_k), (v32, r_v)):
        assert a.shape == b.shape
        assert float(jnp.max(jnp.abs(a - b))) < 5e-2

    # default bf16 MXU-input path (fast path on v6e/v7x): looser tolerance
    out, q, k, v = multi_attention_transformer(x, params, H, Hs)
    jax.block_until_ready((out, q, k, v))
    assert out.shape == (B, N, C)
    assert q.shape == (B, H, N, Hs)
    assert k.shape == (B, H, N, Hs)
    assert v.shape == (B, H, N, Hs)
    for a, b in ((out, r_out), (q, r_q), (k, r_k), (v, r_v)):
        assert float(jnp.max(jnp.abs(a - b))) < 2e-1

    print("KERNEL_OK")
</pallas_src>

<mosaic_0001>
module attributes {stable_mosaic.version = 11 : i64} {
  func.func @fused_transformer_kernel(%arg0: i32, %arg1: i32, %arg2: memref<32x32xf32, #tpu.memory_space<vmem>>, %arg3: memref<1x1x32xf32, #tpu.memory_space<vmem>>, %arg4: memref<1x1x32xf32, #tpu.memory_space<vmem>>, %arg5: memref<1x32x96xf32, #tpu.memory_space<vmem>>, %arg6: memref<1x1x96xf32, #tpu.memory_space<vmem>>, %arg7: memref<1x32x32xf32, #tpu.memory_space<vmem>>, %arg8: memref<1x1x32xf32, #tpu.memory_space<vmem>>, %arg9: memref<1x32xf32, #tpu.memory_space<vmem>>, %arg10: memref<1x32xf32, #tpu.memory_space<vmem>>, %arg11: memref<32x32xf32, #tpu.memory_space<vmem>>, %arg12: memref<32x32xf32, #tpu.memory_space<vmem>>, %arg13: memref<32x32xf32, #tpu.memory_space<vmem>>, %arg14: memref<32x32xf32, #tpu.memory_space<vmem>>) attributes {dimension_semantics = [#tpu.dimension_semantics<parallel>, #tpu.dimension_semantics<arbitrary>], iteration_bounds = array<i64: 1, 2>, scalar_prefetch = 0 : i64, scratch_operands = 0 : i64, tpu.core_type = #tpu.core_type<tc>, window_params = [{transform_indices = @transform_0, window_bounds = array<i64: 32, 32>}, {transform_indices = @transform_1, window_bounds = array<i64: 1, 1, 32>}, {transform_indices = @transform_2, window_bounds = array<i64: 1, 1, 32>}, {transform_indices = @transform_3, window_bounds = array<i64: 1, 32, 96>}, {transform_indices = @transform_4, window_bounds = array<i64: 1, 1, 96>}, {transform_indices = @transform_5, window_bounds = array<i64: 1, 32, 32>}, {transform_indices = @transform_6, window_bounds = array<i64: 1, 1, 32>}, {pipeline_mode = #tpu.pipeline_mode<synchronous>, transform_indices = @transform_7, window_bounds = array<i64: 1, 32>}, {pipeline_mode = #tpu.pipeline_mode<synchronous>, transform_indices = @transform_8, window_bounds = array<i64: 1, 32>}, {transform_indices = @transform_9, window_bounds = array<i64: 32, 32>}, {transform_indices = @transform_10, window_bounds = array<i64: 32, 32>}, {transform_indices = @transform_11, window_bounds = array<i64: 32, 32>}, {transform_indices = @transform_12, window_bounds = array<i64: 32, 32>}]} {
    %c0_i32 = arith.constant 0 : i32
    %0 = arith.cmpi eq, %arg1, %c0_i32 : i32
    %1 = arith.extui %0 : i1 to i32
    %c0_i32_0 = arith.constant 0 : i32
    %2 = arith.cmpi ne, %1, %c0_i32_0 : i32
    scf.if %2 {
      %c0_33 = arith.constant 0 : index
      %c0_34 = arith.constant 0 : index
      %110 = vector.load %arg2[%c0_33, %c0_34] : memref<32x32xf32, #tpu.memory_space<vmem>>, vector<32x32xf32>
      %c0_35 = arith.constant 0 : index
      %c0_36 = arith.constant 0 : index
      %111 = vector.load %arg11[%c0_35, %c0_36] : memref<32x32xf32, #tpu.memory_space<vmem>>, vector<32x32xf32>
      tpu.vector_store %arg11[%c0_35, %c0_36], %110 {strides = array<i32>} : memref<32x32xf32, #tpu.memory_space<vmem>>, vector<32x32xf32>,
    } else {
    }
    %c0 = arith.constant 0 : index
    %c0_1 = arith.constant 0 : index
    %3 = vector.load %arg11[%c0, %c0_1] : memref<32x32xf32, #tpu.memory_space<vmem>>, vector<32x32xf32>
    %cst = arith.constant dense<0.000000e+00> : vector<32xf32>
    %4 = vector.multi_reduction <add>, %3, %cst [1] : vector<32x32xf32> to vector<32xf32>
    %5 = vector.shape_cast %4 : vector<32xf32> to vector<32x1xf32>
    %cst_2 = arith.constant 3.200000e+01 : f32
    %6 = vector.broadcast %cst_2 : f32 to vector<32x1xf32>
    %7 = arith.divf %5, %6 : vector<32x1xf32>
    %8 = vector.broadcast %7 : vector<32x1xf32> to vector<32x32xf32>
    %9 = arith.subf %3, %8 : vector<32x32xf32>
    %10 = arith.mulf %9, %9 : vector<32x32xf32>
    %cst_3 = arith.constant dense<0.000000e+00> : vector<32xf32>
    %11 = vector.multi_reduction <add>, %10, %cst_3 [1] : vector<32x32xf32> to vector<32xf32>
    %12 = vector.shape_cast %11 : vector<32xf32> to vector<32x1xf32>
    %cst_4 = arith.constant 3.200000e+01 : f32
    %13 = vector.broadcast %cst_4 : f32 to vector<32x1xf32>
    %14 = arith.divf %12, %13 : vector<32x1xf32>
    %15 = vector.broadcast %7 : vector<32x1xf32> to vector<32x32xf32>
    %16 = arith.subf %3, %15 : vector<32x32xf32>
    %cst_5 = arith.constant 9.99999974E-6 : f32
    %17 = vector.broadcast %cst_5 : f32 to vector<32x1xf32>
    %18 = arith.addf %14, %17 : vector<32x1xf32>
    %19 = math.rsqrt %18 : vector<32x1xf32>
    %20 = vector.broadcast %19 : vector<32x1xf32> to vector<32x32xf32>
    %21 = arith.mulf %16, %20 : vector<32x32xf32>
    %c0_6 = arith.constant 0 : index
    %c0_7 = arith.constant 0 : index
    %c0_8 = arith.constant 0 : index
    %22 = vector.load %arg3[%c0_6, %c0_7, %c0_8] : memref<1x1x32xf32, #tpu.memory_space<vmem>>, vector<1x1x32xf32>
    %23 = vector.shape_cast %22 : vector<1x1x32xf32> to vector<1x32xf32>
    %24 = vector.broadcast %23 : vector<1x32xf32> to vector<32x32xf32>
    %25 = arith.mulf %21, %24 : vector<32x32xf32>
    %c0_9 = arith.constant 0 : index
    %c0_10 = arith.constant 0 : index
    %c0_11 = arith.constant 0 : index
    %26 = vector.load %arg4[%c0_9, %c0_10, %c0_11] : memref<1x1x32xf32, #tpu.memory_space<vmem>>, vector<1x1x32xf32>
    %27 = vector.shape_cast %26 : vector<1x1x32xf32> to vector<1x32xf32>
    %28 = vector.broadcast %27 : vector<1x32xf32> to vector<32x32xf32>
    %29 = arith.addf %25, %28 : vector<32x32xf32>
    %c0_12 = arith.constant 0 : index
    %c0_13 = arith.constant 0 : index
    %c0_14 = arith.constant 0 : index
    %30 = vector.load %arg5[%c0_12, %c0_13, %c0_14] : memref<1x32x96xf32, #tpu.memory_space<vmem>>, vector<1x32x96xf32>
    %31 = vector.shape_cast %30 : vector<1x32x96xf32> to vector<32x96xf32>
    %cst_15 = arith.constant dense<0.000000e+00> : vector<32x96xf32>
    %32 = tpu.matmul %29, %31, %cst_15 {dimension_numbers = #tpu.dot_dimension_numbers<[1], [0], [0], [1], [0, 0, 1, 1], [], []>} : vector<32x32xf32>, vector<32x96xf32>, vector<32x96xf32> -> vector<32x96xf32>
    %c0_16 = arith.constant 0 : index
    %c0_17 = arith.constant 0 : index
    %c0_18 = arith.constant 0 : index
    %33 = vector.load %arg6[%c0_16, %c0_17, %c0_18] : memref<1x1x96xf32, #tpu.memory_space<vmem>>, vector<1x1x96xf32>
    %34 = vector.shape_cast %33 : vector<1x1x96xf32> to vector<1x96xf32>
    %35 = vector.broadcast %34 : vector<1x96xf32> to vector<32x96xf32>
    %36 = arith.addf %32, %35 : vector<32x96xf32>
    %37 = vector.extract_strided_slice %36 {offsets = [0, 0], sizes = [32, 32], strides = [1, 1]} : vector<32x96xf32> to vector<32x32xf32>
    %38 = vector.extract_strided_slice %36 {offsets = [0, 32], sizes = [32, 32], strides = [1, 1]} : vector<32x96xf32> to vector<32x32xf32>
    %39 = vector.extract_strided_slice %36 {offsets = [0, 64], sizes = [32, 32], strides = [1, 1]} : vector<32x96xf32> to vector<32x32xf32>
    %40 = vector.extract_strided_slice %37 {offsets = [0, 0], sizes = [32, 8], strides = [1, 1]} : vector<32x32xf32> to vector<32x8xf32>
    %41 = vector.extract_strided_slice %37 {offsets = [0, 8], sizes = [32, 8], strides = [1, 1]} : vector<32x32xf32> to vector<32x8xf32>
    %42 = vector.extract_strided_slice %37 {offsets = [0, 16], sizes = [32, 8], strides = [1, 1]} : vector<32x32xf32> to vector<32x8xf32>
    %43 = vector.extract_strided_slice %37 {offsets = [0, 24], sizes = [32, 8], strides = [1, 1]} : vector<32x32xf32> to vector<32x8xf32>
    %44 = vector.shape_cast %40 : vector<32x8xf32> to vector<1x32x8xf32>
    %45 = vector.shape_cast %41 : vector<32x8xf32> to vector<1x32x8xf32>
    %46 = vector.shape_cast %42 : vector<32x8xf32> to vector<1x32x8xf32>
    %47 = vector.shape_cast %43 : vector<32x8xf32> to vector<1x32x8xf32>
    %48 = tpu.concatenate %44, %45, %46, %47 in 0 : vector<1x32x8xf32>, vector<1x32x8xf32>, vector<1x32x8xf32>, vector<1x32x8xf32> -> vector<4x32x8xf32>
    %49 = vector.shape_cast %48 : vector<4x32x8xf32> to vector<4x2x16x8xf32>
    %50 = vector.shape_cast %49 : vector<4x2x16x8xf32> to vector<8x16x8xf32>
    %51 = vector.extract_strided_slice %38 {offsets = [0, 0], sizes = [32, 8], strides = [1, 1]} : vector<32x32xf32> to vector<32x8xf32>
    %52 = vector.extract_strided_slice %38 {offsets = [0, 8], sizes = [32, 8], strides = [1, 1]} : vector<32x32xf32> to vector<32x8xf32>
    %53 = vector.extract_strided_slice %38 {offsets = [0, 16], sizes = [32, 8], strides = [1, 1]} : vector<32x32xf32> to vector<32x8xf32>
    %54 = vector.extract_strided_slice %38 {offsets = [0, 24], sizes = [32, 8], strides = [1, 1]} : vector<32x32xf32> to vector<32x8xf32>
    %55 = vector.shape_cast %51 : vector<32x8xf32> to vector<1x32x8xf32>
    %56 = vector.shape_cast %52 : vector<32x8xf32> to vector<1x32x8xf32>
    %57 = vector.shape_cast %53 : vector<32x8xf32> to vector<1x32x8xf32>
    %58 = vector.shape_cast %54 : vector<32x8xf32> to vector<1x32x8xf32>
    %59 = tpu.concatenate %55, %56, %57, %58 in 0 : vector<1x32x8xf32>, vector<1x32x8xf32>, vector<1x32x8xf32>, vector<1x32x8xf32> -> vector<4x32x8xf32>
    %60 = vector.shape_cast %59 : vector<4x32x8xf32> to vector<4x2x16x8xf32>
    %61 = vector.shape_cast %60 : vector<4x2x16x8xf32> to vector<8x16x8xf32>
    %62 = vector.extract_strided_slice %39 {offsets = [0, 0], sizes = [32, 8], strides = [1, 1]} : vector<32x32xf32> to vector<32x8xf32>
    %63 = vector.extract_strided_slice %39 {offsets = [0, 8], sizes = [32, 8], strides = [1, 1]} : vector<32x32xf32> to vector<32x8xf32>
    %64 = vector.extract_strided_slice %39 {offsets = [0, 16], sizes = [32, 8], strides = [1, 1]} : vector<32x32xf32> to vector<32x8xf32>
    %65 = vector.extract_strided_slice %39 {offsets = [0, 24], sizes = [32, 8], strides = [1, 1]} : vector<32x32xf32> to vector<32x8xf32>
    %66 = vector.shape_cast %62 : vector<32x8xf32> to vector<1x32x8xf32>
    %67 = vector.shape_cast %63 : vector<32x8xf32> to vector<1x32x8xf32>
    %68 = vector.shape_cast %64 : vector<32x8xf32> to vector<1x32x8xf32>
    %69 = vector.shape_cast %65 : vector<32x8xf32> to vector<1x32x8xf32>
    %70 = tpu.concatenate %66, %67, %68, %69 in 0 : vector<1x32x8xf32>, vector<1x32x8xf32>, vector<1x32x8xf32>, vector<1x32x8xf32> -> vector<4x32x8xf32>
    %71 = vector.shape_cast %70 : vector<4x32x8xf32> to vector<4x2x16x8xf32>
    %72 = vector.shape_cast %71 : vector<4x2x16x8xf32> to vector<8x16x8xf32>
    "tpu.trace_start"() <{level = 10 : i32, message = "gqd,gkd->gqk"}> : () -> ()
    %cst_19 = arith.constant dense<0.000000e+00> : vector<8x16x16xf32>
    %73 = tpu.matmul %50, %61, %cst_19 {dimension_numbers = #tpu.dot_dimension_numbers<[2], [2], [1], [1], [0, 0, 0, 1, 1, 1], [0], [0]>} : vector<8x16x8xf32>, vector<8x16x8xf32>, vector<8x16x16xf32> -> vector<8x16x16xf32>
    "tpu.trace_stop"() : () -> ()
    %cst_20 = arith.constant dense<0xFF800000> : vector<8x16xf32>
    %74 = vector.multi_reduction <maximumf>, %73, %cst_20 [2] : vector<8x16x16xf32> to vector<8x16xf32>
    %75 = vector.shape_cast %74 : vector<8x16xf32> to vector<8x16x1xf32>
    %76 = vector.broadcast %75 : vector<8x16x1xf32> to vector<8x16x16xf32>
    %77 = arith.subf %73, %76 : vector<8x16x16xf32>
    %78 = math.exp %77 : vector<8x16x16xf32>
    %cst_21 = arith.constant dense<0.000000e+00> : vector<8x16xf32>
    %79 = vector.multi_reduction <add>, %78, %cst_21 [2] : vector<8x16x16xf32> to vector<8x16xf32>
    %80 = vector.shape_cast %79 : vector<8x16xf32> to vector<8x16x1xf32>
    %81 = tpu.reciprocal %80 {approx = true} : vector<8x16x1xf32> -> vector<8x16x1xf32>
    %82 = vector.broadcast %81 : vector<8x16x1xf32> to vector<8x16x16xf32>
    %83 = arith.mulf %78, %82 : vector<8x16x16xf32>
    "tpu.trace_start"() <{level = 10 : i32, message = "gqk,gkd->gqd"}> : () -> ()
    %cst_22 = arith.constant dense<0.000000e+00> : vector<8x16x8xf32>
    %84 = tpu.matmul %83, %72, %cst_22 {dimension_numbers = #tpu.dot_dimension_numbers<[2], [1], [1], [2], [0, 0, 0, 1, 1, 2], [0], [0]>} : vector<8x16x16xf32>, vector<8x16x8xf32>, vector<8x16x8xf32> -> vector<8x16x8xf32>
    "tpu.trace_stop"() : () -> ()
    %85 = vector.shape_cast %84 : vector<8x16x8xf32> to vector<4x2x16x8xf32>
    %86 = vector.shape_cast %85 : vector<4x2x16x8xf32> to vector<4x32x8xf32>
    %87 = vector.extract_strided_slice %86 {offsets = [0, 0, 0], sizes = [1, 32, 8], strides = [1, 1, 1]} : vector<4x32x8xf32> to vector<1x32x8xf32>
    %88 = vector.shape_cast %87 : vector<1x32x8xf32> to vector<32x8xf32>
    %89 = vector.extract_strided_slice %86 {offsets = [1, 0, 0], sizes = [1, 32, 8], strides = [1, 1, 1]} : vector<4x32x8xf32> to vector<1x32x8xf32>
    %90 = vector.shape_cast %89 : vector<1x32x8xf32> to vector<32x8xf32>
    %91 = vector.extract_strided_slice %86 {offsets = [2, 0, 0], sizes = [1, 32, 8], strides = [1, 1, 1]} : vector<4x32x8xf32> to vector<1x32x8xf32>
    %92 = vector.shape_cast %91 : vector<1x32x8xf32> to vector<32x8xf32>
    %93 = vector.extract_strided_slice %86 {offsets = [3, 0, 0], sizes = [1, 32, 8], strides = [1, 1, 1]} : vector<4x32x8xf32> to vector<1x32x8xf32>
    %94 = vector.shape_cast %93 : vector<1x32x8xf32> to vector<32x8xf32>
    %95 = tpu.concatenate %88, %90, %92, %94 in 1 : vector<32x8xf32>, vector<32x8xf32>, vector<32x8xf32>, vector<32x8xf32> -> vector<32x32xf32>
    %c0_23 = arith.constant 0 : index
    %c0_24 = arith.constant 0 : index
    %c0_25 = arith.constant 0 : index
    %96 = vector.load %arg7[%c0_23, %c0_24, %c0_25] : memref<1x32x32xf32, #tpu.memory_space<vmem>>, vector<1x32x32xf32>
    %97 = vector.shape_cast %96 : vector<1x32x32xf32> to vector<32x32xf32>
    %cst_26 = arith.constant dense<0.000000e+00> : vector<32x32xf32>
    %98 = tpu.matmul %95, %97, %cst_26 {dimension_numbers = #tpu.dot_dimension_numbers<[1], [0], [0], [1], [0, 0, 1, 1], [], []>} : vector<32x32xf32>, vector<32x32xf32>, vector<32x32xf32> -> vector<32x32xf32>
    %c0_27 = arith.constant 0 : index
    %c0_28 = arith.constant 0 : index
    %c0_29 = arith.constant 0 : index
    %99 = vector.load %arg8[%c0_27, %c0_28, %c0_29] : memref<1x1x32xf32, #tpu.memory_space<vmem>>, vector<1x1x32xf32>
    %100 = vector.shape_cast %99 : vector<1x1x32xf32> to vector<1x32xf32>
    %101 = vector.broadcast %100 : vector<1x32xf32> to vector<32x32xf32>
    %102 = arith.addf %98, %101 : vector<32x32xf32>
    %103 = arith.addf %3, %102 : vector<32x32xf32>
    %c1_i32 = arith.constant 1 : i32
    %104 = arith.cmpi slt, %arg1, %c1_i32 : i32
    %105 = arith.extui %104 : i1 to i32
    %c0_i32_30 = arith.constant 0 : i32
    %106 = arith.cmpi ne, %105, %c0_i32_30 : i32
    scf.if %106 {
      %c0_33 = arith.constant 0 : index
      %c0_34 = arith.constant 0 : index
      %110 = vector.load %arg11[%c0_33, %c0_34] : memref<32x32xf32, #tpu.memory_space<vmem>>, vector<32x32xf32>
      tpu.vector_store %arg11[%c0_33, %c0_34], %103 {strides = array<i32>} : memref<32x32xf32, #tpu.memory_space<vmem>>, vector<32x32xf32>,
    } else {
    }
    %c1_i32_31 = arith.constant 1 : i32
    %107 = arith.cmpi eq, %arg1, %c1_i32_31 : i32
    %108 = arith.extui %107 : i1 to i32
    %c0_i32_32 = arith.constant 0 : i32
    %109 = arith.cmpi ne, %108, %c0_i32_32 : i32
    scf.if %109 {
      %cst_33 = arith.constant dense<0.000000e+00> : vector<32xf32>
      %110 = vector.multi_reduction <add>, %103, %cst_33 [1] : vector<32x32xf32> to vector<32xf32>
      %111 = vector.shape_cast %110 : vector<32xf32> to vector<32x1xf32>
      %cst_34 = arith.constant 3.200000e+01 : f32
      %112 = vector.broadcast %cst_34 : f32 to vector<32x1xf32>
      %113 = arith.divf %111, %112 : vector<32x1xf32>
      %114 = vector.broadcast %113 : vector<32x1xf32> to vector<32x32xf32>
      %115 = arith.subf %103, %114 : vector<32x32xf32>
      %116 = arith.mulf %115, %115 : vector<32x32xf32>
      %cst_35 = arith.constant dense<0.000000e+00> : vector<32xf32>
      %117 = vector.multi_reduction <add>, %116, %cst_35 [1] : vector<32x32xf32> to vector<32xf32>
      %118 = vector.shape_cast %117 : vector<32xf32> to vector<32x1xf32>
      %cst_36 = arith.constant 3.200000e+01 : f32
      %119 = vector.broadcast %cst_36 : f32 to vector<32x1xf32>
      %120 = arith.divf %118, %119 : vector<32x1xf32>
      %121 = vector.broadcast %113 : vector<32x1xf32> to vector<32x32xf32>
      %122 = arith.subf %103, %121 : vector<32x32xf32>
      %cst_37 = arith.constant 9.99999974E-6 : f32
      %123 = vector.broadcast %cst_37 : f32 to vector<32x1xf32>
      %124 = arith.addf %120, %123 : vector<32x1xf32>
      %125 = math.rsqrt %124 : vector<32x1xf32>
      %126 = vector.broadcast %125 : vector<32x1xf32> to vector<32x32xf32>
      %127 = arith.mulf %122, %126 : vector<32x32xf32>
      %c0_38 = arith.constant 0 : index
      %c0_39 = arith.constant 0 : index
      %128 = vector.load %arg9[%c0_38, %c0_39] : memref<1x32xf32, #tpu.memory_space<vmem>>, vector<1x32xf32>
      %129 = vector.broadcast %128 : vector<1x32xf32> to vector<32x32xf32>
      %130 = arith.mulf %127, %129 : vector<32x32xf32>
      %c0_40 = arith.constant 0 : index
      %c0_41 = arith.constant 0 : index
      %131 = vector.load %arg10[%c0_40, %c0_41] : memref<1x32xf32, #tpu.memory_space<vmem>>, vector<1x32xf32>
      %132 = vector.broadcast %131 : vector<1x32xf32> to vector<32x32xf32>
      %133 = arith.addf %130, %132 : vector<32x32xf32>
      %c0_42 = arith.constant 0 : index
      %c0_43 = arith.constant 0 : index
      %134 = vector.load %arg11[%c0_42, %c0_43] : memref<32x32xf32, #tpu.memory_space<vmem>>, vector<32x32xf32>
      tpu.vector_store %arg11[%c0_42, %c0_43], %133 {strides = array<i32>} : memref<32x32xf32, #tpu.memory_space<vmem>>, vector<32x32xf32>,
      %cst_44 = arith.constant 2.82842708 : f32
      %135 = vector.broadcast %cst_44 : f32 to vector<32x32xf32>
      %136 = arith.mulf %37, %135 : vector<32x32xf32>
      %c0_45 = arith.constant 0 : index
      %c0_46 = arith.constant 0 : index
      %137 = vector.load %arg12[%c0_45, %c0_46] : memref<32x32xf32, #tpu.memory_space<vmem>>, vector<32x32xf32>
      tpu.vector_store %arg12[%c0_45, %c0_46], %136 {strides = array<i32>} : memref<32x32xf32, #tpu.memory_space<vmem>>, vector<32x32xf32>,
      %c0_47 = arith.constant 0 : index
      %c0_48 = arith.constant 0 : index
      %138 = vector.load %arg13[%c0_47, %c0_48] : memref<32x32xf32, #tpu.memory_space<vmem>>, vector<32x32xf32>
      tpu.vector_store %arg13[%c0_47, %c0_48], %38 {strides = array<i32>} : memref<32x32xf32, #tpu.memory_space<vmem>>, vector<32x32xf32>,
      %c0_49 = arith.constant 0 : index
      %c0_50 = arith.constant 0 : index
      %139 = vector.load %arg14[%c0_49, %c0_50] : memref<32x32xf32, #tpu.memory_space<vmem>>, vector<32x32xf32>
      tpu.vector_store %arg14[%c0_49, %c0_50], %39 {strides = array<i32>} : memref<32x32xf32, #tpu.memory_space<vmem>>, vector<32x32xf32>,
    } else {
    }
    return
  }
  func.func @transform_0(%arg0: i32, %arg1: i32) -> (i32, i32) {
    %c0_i32 = arith.constant 0 : i32
    %c0_i32_0 = arith.constant 0 : i32
    return %arg0, %c0_i32 : i32, i32
  }
  func.func @transform_1(%arg0: i32, %arg1: i32) -> (i32, i32, i32) {
    %c0_i32 = arith.constant 0 : i32
    %c0_i32_0 = arith.constant 0 : i32
    %c0_i32_1 = arith.constant 0 : i32
    return %arg1, %c0_i32, %c0_i32_0 : i32, i32, i32
  }
  func.func @transform_2(%arg0: i32, %arg1: i32) -> (i32, i32, i32) {
    %c0_i32 = arith.constant 0 : i32
    %c0_i32_0 = arith.constant 0 : i32
    %c0_i32_1 = arith.constant 0 : i32
    return %arg1, %c0_i32, %c0_i32_0 : i32, i32, i32
  }
  func.func @transform_3(%arg0: i32, %arg1: i32) -> (i32, i32, i32) {
    %c0_i32 = arith.constant 0 : i32
    %c0_i32_0 = arith.constant 0 : i32
    %c0_i32_1 = arith.constant 0 : i32
    return %arg1, %c0_i32, %c0_i32_0 : i32, i32, i32
  }
  func.func @transform_4(%arg0: i32, %arg1: i32) -> (i32, i32, i32) {
    %c0_i32 = arith.constant 0 : i32
    %c0_i32_0 = arith.constant 0 : i32
    %c0_i32_1 = arith.constant 0 : i32
    return %arg1, %c0_i32, %c0_i32_0 : i32, i32, i32
  }
  func.func @transform_5(%arg0: i32, %arg1: i32) -> (i32, i32, i32) {
    %c0_i32 = arith.constant 0 : i32
    %c0_i32_0 = arith.constant 0 : i32
    %c0_i32_1 = arith.constant 0 : i32
    return %arg1, %c0_i32, %c0_i32_0 : i32, i32, i32
  }
  func.func @transform_6(%arg0: i32, %arg1: i32) -> (i32, i32, i32) {
    %c0_i32 = arith.constant 0 : i32
    %c0_i32_0 = arith.constant 0 : i32
    %c0_i32_1 = arith.constant 0 : i32
    return %arg1, %c0_i32, %c0_i32_0 : i32, i32, i32
  }
  func.func @transform_7(%arg0: i32, %arg1: i32) -> (i32, i32) {
    %c0_i32 = arith.constant 0 : i32
    %c0_i32_0 = arith.constant 0 : i32
    %c0_i32_1 = arith.constant 0 : i32
    return %c0_i32, %c0_i32_0 : i32, i32
  }
  func.func @transform_8(%arg0: i32, %arg1: i32) -> (i32, i32) {
    %c0_i32 = arith.constant 0 : i32
    %c0_i32_0 = arith.constant 0 : i32
    %c0_i32_1 = arith.constant 0 : i32
    return %c0_i32, %c0_i32_0 : i32, i32
  }
  func.func @transform_9(%arg0: i32, %arg1: i32) -> (i32, i32) {
    %c0_i32 = arith.constant 0 : i32
    %c0_i32_0 = arith.constant 0 : i32
    return %arg0, %c0_i32 : i32, i32
  }
  func.func @transform_10(%arg0: i32, %arg1: i32) -> (i32, i32) {
    %c0_i32 = arith.constant 0 : i32
    %c0_i32_0 = arith.constant 0 : i32
    return %arg0, %c0_i32 : i32, i32
  }
  func.func @transform_11(%arg0: i32, %arg1: i32) -> (i32, i32) {
    %c0_i32 = arith.constant 0 : i32
    %c0_i32_0 = arith.constant 0 : i32
    return %arg0, %c0_i32 : i32, i32
  }
  func.func @transform_12(%arg0: i32, %arg1: i32) -> (i32, i32) {
    %c0_i32 = arith.constant 0 : i32
    %c0_i32_0 = arith.constant 0 : i32
    return %arg0, %c0_i32 : i32, i32
  }
}

</mosaic_0001>

<llo_original>
// kernel: tpu_custom_call.1
$region0: #{tpu_custom_call.1}
  #allocation0 [shape = 'u32[]', space=smem, size = 0x4, offset = 0x4, fixed_abs, tag = 'smem constant byte address 0x4 - core index']
  #allocation1 [shape = 'u32[72,128]{1,0:T(1,128)}', space=vmem, size = 0x9000, scoped, tag = 'internal scratch']
  %s0 = inlined_call_operand.hbm [shape: f32[32,32], index: 0, kind: input, shape index: {}]
  %s1 = inlined_call_operand.hbm [shape: f32[2,1,32], index: 1, kind: input, shape index: {}]
  %s2 = inlined_call_operand.hbm [shape: f32[2,1,32], index: 2, kind: input, shape index: {}]
  %s3 = inlined_call_operand.hbm [shape: f32[2,32,96], index: 3, kind: input, shape index: {}]
  %s4 = inlined_call_operand.vmem [shape: f32[2,1,96], index: 4, kind: input, shape index: {}]
  %s5 = inlined_call_operand.hbm [shape: f32[2,32,32], index: 5, kind: input, shape index: {}]
  %s6 = inlined_call_operand.vmem [shape: f32[2,1,32], index: 6, kind: input, shape index: {}]
  %s7 = inlined_call_operand.vmem [shape: f32[1,32], index: 7, kind: input, shape index: {}]
  %s8 = inlined_call_operand.vmem [shape: f32[1,32], index: 8, kind: input, shape index: {}]
  %s9 = inlined_call_operand.hbm [shape: f32[32,32], index: 9, kind: output, shape index: {0}]
  %s10 = inlined_call_operand.hbm [shape: f32[32,32], index: 10, kind: output, shape index: {1}]
  %s11 = inlined_call_operand.hbm [shape: f32[32,32], index: 11, kind: output, shape index: {2}]
  %s12 = inlined_call_operand.hbm [shape: f32[32,32], index: 12, kind: output, shape index: {3}]
  %13 = xla_tuple %s9, %s10, %s11, %s12
  %s14 = sld [smem:[#allocation0]]
  $region125: #{tpu_custom_call.1} parent=0
    _
  %s16 = ssub.s32 1, %s14
  %s17 = scalar_select 0, %s16, %s14
  $region1: #{tpu_custom_call.1} parent=0
    #allocation2 [shape = 'u8[16384]{0}', space=vmem, size = 0x4000, scoped, tag = 'input window, operand 0, single buffered']
    #allocation3 [shape = 's32[2]{0}', space=sflag, size = 0x8, scoped, tag = 'scoped memory for tpu_custom_call.1']
    #allocation4 [shape = 's32[2]{0}', space=sflag, size = 0x8, scoped, tag = 'scoped memory for tpu_custom_call.1']
    #allocation5 [shape = 'u8[1024]{0}', space=vmem, size = 0x400, scoped, tag = 'input window, operand 1']
    #allocation6 [shape = 's32[2]{0}', space=sflag, size = 0x8, scoped, tag = 'scoped memory for tpu_custom_call.1']
    #allocation7 [shape = 'u8[1024]{0}', space=vmem, size = 0x400, scoped, tag = 'input window, operand 2']
    #allocation8 [shape = 'u8[32768]{0}', space=vmem, size = 0x8000, scoped, tag = 'input window, operand 3']
    #allocation9 [shape = 's32[2]{0}', space=sflag, size = 0x8, scoped, tag = 'scoped memory for tpu_custom_call.1']
    #allocation10 [shape = 'u8[32768]{0}', space=vmem, size = 0x8000, scoped, tag = 'input window, operand 5']
    #allocation11 [shape = 'u8[16384]{0}', space=vmem, size = 0x4000, scoped, tag = 'output window, operand 0, single buffered']
    #allocation12 [shape = 'u8[16384]{0}', space=vmem, size = 0x4000, scoped, tag = 'output window, operand 1, single buffered']
    #allocation13 [shape = 's32[1]{0}', space=sflag, size = 0x4, scoped, tag = 'scoped memory for tpu_custom_call.1']
    #allocation14 [shape = 'u8[16384]{0}', space=vmem, size = 0x4000, scoped, tag = 'output window, operand 2, single buffered']
    #allocation15 [shape = 'u8[16384]{0}', space=vmem, size = 0x4000, scoped, tag = 'output window, operand 3, single buffered']
    #allocation16 [shape = 's32[1]{0}', space=sflag, size = 0x4, scoped, tag = 'scoped memory for tpu_custom_call.1']
    %18 = vsyncpa [#allocation3], 0
    %19 = vsyncpa [#allocation6], 0
    %s20 = scalar_lea.sflag [#allocation6], 1
    %21 = vsyncpa %s20, 0
    %22 = vsyncpa [#allocation9], 0
    %s23 = scalar_lea.sflag [#allocation9], 1
    %24 = vsyncpa %s23, 0
    %25 = vsyncpa [#allocation4], 0
    %26 = vsyncpa [#allocation13], 0
    %27 = vsyncpa [#allocation16], 0
    loop: start=0, step=1, limit=4
    $region2: #{tpu_custom_call.1} parent=1 // loop_pre_header
      _
    $region3: #{tpu_custom_call.1} parent=1 // loop_header
      %s29 = sphi 0, %s33
      %p30 = scmp.ge.s32.totalorder %s29, 4
      %s36 = sphi 0, %s48
      %s37 = sphi 0, %s44
      %s38 = sphi 0, %s36
      %s39 = sphi 0, %s37
      %s40 = sphi 0, %s38
      %s41 = sphi 0, %s39
      %s51 = sphi 0, %s53
      %s54 = sphi 0, %s51
      %s55 = sphi 0, %s54
      %s71 = sphi 0, %s55
      %s77 = sphi 0, %s79
      %s80 = sphi 0, %s77
      %s81 = sphi 0, %s80
      %s97 = sphi 0, %s81
      %s103 = sphi 0, %s105
      %s106 = sphi 0, %s103
      %s107 = sphi 0, %s106
      %s123 = sphi 0, %s107
      %s129 = sphi 0, %s131
      %s132 = sphi 0, %s129
      %s133 = sphi 0, %s132
      %s149 = sphi 0, %s133
      %s155 = sphi 0, %s157
      %s158 = sphi 0, %s155
      %s159 = sphi 0, %s158
      %s175 = sphi 0, %s159
      %s181 = sphi 0, %s183
      %s184 = sphi 0, %s181
      %s185 = sphi 0, %s184
      %s201 = sphi 0, %s185
      %s207 = sphi 0, %s209
      %s210 = sphi 0, %s207
      %s211 = sphi 0, %s210
      %s227 = sphi 0, %s211
      %s231 = sphi 0, %s231
      %s233 = sphi 0, %s231
      %s234 = sphi 0, %s233
      %s248 = sphi 0, %s234
      %s252 = sphi 0, %s252
      %s254 = sphi 0, %s252
      %s255 = sphi 0, %s254
      %s269 = sphi 0, %s255
      %s275 = sphi 0, %s277
      %s278 = sphi 0, %s275
      %s279 = sphi 0, %s278
      %s295 = sphi 0, %s279
      %s301 = sphi 0, %s303
      %s304 = sphi 0, %s301
      %s305 = sphi 0, %s304
      %s321 = sphi 0, %s305
      %s327 = sphi 0, %s329
      %s330 = sphi 0, %s327
      %s331 = sphi 0, %s330
      %s347 = sphi 0, %s331
      %s353 = sphi 0, %s355
      %s356 = sphi 0, %s353
      %s357 = sphi 0, %s356
      %s373 = sphi 0, %s357
    $region4: #{tpu_custom_call.1} parent=1 // loop_header_branch
      %32 = sbr.rel (%p30) target = $region8
    $region5: #{tpu_custom_call.1} parent=1 // loop_body
      %s34 = ssub.s32 %s29, 1
      %s35 = ssub.s32 %s29, 2
      %s42 = sadd.s32 1, %s37
      %p43 = scmp.ge.s32.totalorder %s42, 2
      %s44 = scalar_select %p43, 0, %s42
      %s45 = sadd.s32 1, %s36
      %s46 = scalar_select %p43, %s45, %s36
      %p47 = scmp.ge.s32.totalorder %s46, 1
      %s48 = scalar_select %p47, 0, %s46
      %s49 = ssub.s32 %s36, %s48
      %p50 = scmp.eq.s32.totalorder %s49, 0
      %s52 = sadd.s32 %s51, 1
      %s53 = scalar_select %p50, %s51, %s52
      %p56 = pneg %p50
      %p57 = scmp.eq.s32.totalorder %s29, 1
      %p58 = por %p56, %p57
      %p59 = scmp.ne.s32.totalorder %s51, %s54
      %p60 = scmp.eq.s32.totalorder %s29, 0
      %p61 = por %p59, %p60
      %p62 = scmp.ne.s32.totalorder %s51, %s54
      %p63 = scmp.eq.s32.totalorder %s34, 1
      %p64 = por %p62, %p63
      %p65 = scmp.ne.s32.totalorder %s54, %s55
      %p66 = scmp.eq.s32.totalorder %s34, 0
      %p67 = por %p65, %p66
      %p68 = scmp.ne.s32.totalorder %s54, %s55
      %p69 = scmp.eq.s32.totalorder %s35, 1
      %p70 = por %p68, %p69
      %p72 = scmp.ne.s32.totalorder %s55, %s71
      %p73 = scmp.eq.s32.totalorder %s35, 0
      %p74 = por %p72, %p73
      %s75 = ssub.s32 %s37, %s44
      %p76 = scmp.eq.s32.totalorder %s75, 0
      %s78 = sadd.s32 %s77, 1
      %s79 = scalar_select %p76, %s77, %s78
      %p82 = pneg %p76
      %p83 = scmp.eq.s32.totalorder %s29, 1
      %p84 = por %p82, %p83
      %p85 = scmp.ne.s32.totalorder %s77, %s80
      %p86 = scmp.eq.s32.totalorder %s29, 0
      %p87 = por %p85, %p86
      %p88 = scmp.ne.s32.totalorder %s77, %s80
      %p89 = scmp.eq.s32.totalorder %s34, 1
      %p90 = por %p88, %p89
      %p91 = scmp.ne.s32.totalorder %s80, %s81
      %p92 = scmp.eq.s32.totalorder %s34, 0
      %p93 = por %p91, %p92
      %p94 = scmp.ne.s32.totalorder %s80, %s81
      %p95 = scmp.eq.s32.totalorder %s35, 1
      %p96 = por %p94, %p95
      %p98 = scmp.ne.s32.totalorder %s81, %s97
      %p99 = scmp.eq.s32.totalorder %s35, 0
      %p100 = por %p98, %p99
      %s101 = ssub.s32 %s37, %s44
      %p102 = scmp.eq.s32.totalorder %s101, 0
      %s104 = sadd.s32 %s103, 1
      %s105 = scalar_select %p102, %s103, %s104
      %p108 = pneg %p102
      %p109 = scmp.eq.s32.totalorder %s29, 1
      %p110 = por %p108, %p109
      %p111 = scmp.ne.s32.totalorder %s103, %s106
      %p112 = scmp.eq.s32.totalorder %s29, 0
      %p113 = por %p111, %p112
      %p114 = scmp.ne.s32.totalorder %s103, %s106
      %p115 = scmp.eq.s32.totalorder %s34, 1
      %p116 = por %p114, %p115
      %p117 = scmp.ne.s32.totalorder %s106, %s107
      %p118 = scmp.eq.s32.totalorder %s34, 0
      %p119 = por %p117, %p118
      %p120 = scmp.ne.s32.totalorder %s106, %s107
      %p121 = scmp.eq.s32.totalorder %s35, 1
      %p122 = por %p120, %p121
      %p124 = scmp.ne.s32.totalorder %s107, %s123
      %p125 = scmp.eq.s32.totalorder %s35, 0
      %p126 = por %p124, %p125
      %s127 = ssub.s32 %s37, %s44
      %p128 = scmp.eq.s32.totalorder %s127, 0
      %s130 = sadd.s32 %s129, 1
      %s131 = scalar_select %p128, %s129, %s130
      %p134 = pneg %p128
      %p135 = scmp.eq.s32.totalorder %s29, 1
      %p136 = por %p134, %p135
      %p137 = scmp.ne.s32.totalorder %s129, %s132
      %p138 = scmp.eq.s32.totalorder %s29, 0
      %p139 = por %p137, %p138
      %p140 = scmp.ne.s32.totalorder %s129, %s132
      %p141 = scmp.eq.s32.totalorder %s34, 1
      %p142 = por %p140, %p141
      %p143 = scmp.ne.s32.totalorder %s132, %s133
      %p144 = scmp.eq.s32.totalorder %s34, 0
      %p145 = por %p143, %p144
      %p146 = scmp.ne.s32.totalorder %s132, %s133
      %p147 = scmp.eq.s32.totalorder %s35, 1
      %p148 = por %p146, %p147
      %p150 = scmp.ne.s32.totalorder %s133, %s149
      %p151 = scmp.eq.s32.totalorder %s35, 0
      %p152 = por %p150, %p151
      %s153 = ssub.s32 %s37, %s44
      %p154 = scmp.eq.s32.totalorder %s153, 0
      %s156 = sadd.s32 %s155, 1
      %s157 = scalar_select %p154, %s155, %s156
      %p160 = pneg %p154
      %p161 = scmp.eq.s32.totalorder %s29, 1
      %p162 = por %p160, %p161
      %p163 = scmp.ne.s32.totalorder %s155, %s158
      %p164 = scmp.eq.s32.totalorder %s29, 0
      %p165 = por %p163, %p164
      %p166 = scmp.ne.s32.totalorder %s155, %s158
      %p167 = scmp.eq.s32.totalorder %s34, 1
      %p168 = por %p166, %p167
      %p169 = scmp.ne.s32.totalorder %s158, %s159
      %p170 = scmp.eq.s32.totalorder %s34, 0
      %p171 = por %p169, %p170
      %p172 = scmp.ne.s32.totalorder %s158, %s159
      %p173 = scmp.eq.s32.totalorder %s35, 1
      %p174 = por %p172, %p173
      %p176 = scmp.ne.s32.totalorder %s159, %s175
      %p177 = scmp.eq.s32.totalorder %s35, 0
      %p178 = por %p176, %p177
      %s179 = ssub.s32 %s37, %s44
      %p180 = scmp.eq.s32.totalorder %s179, 0
      %s182 = sadd.s32 %s181, 1
      %s183 = scalar_select %p180, %s181, %s182
      %p186 = pneg %p180
      %p187 = scmp.eq.s32.totalorder %s29, 1
      %p188 = por %p186, %p187
      %p189 = scmp.ne.s32.totalorder %s181, %s184
      %p190 = scmp.eq.s32.totalorder %s29, 0
      %p191 = por %p189, %p190
      %p192 = scmp.ne.s32.totalorder %s181, %s184
      %p193 = scmp.eq.s32.totalorder %s34, 1
      %p194 = por %p192, %p193
      %p195 = scmp.ne.s32.totalorder %s184, %s185
      %p196 = scmp.eq.s32.totalorder %s34, 0
      %p197 = por %p195, %p196
      %p198 = scmp.ne.s32.totalorder %s184, %s185
      %p199 = scmp.eq.s32.totalorder %s35, 1
      %p200 = por %p198, %p199
      %p202 = scmp.ne.s32.totalorder %s185, %s201
      %p203 = scmp.eq.s32.totalorder %s35, 0
      %p204 = por %p202, %p203
      %s205 = ssub.s32 %s37, %s44
      %p206 = scmp.eq.s32.totalorder %s205, 0
      %s208 = sadd.s32 %s207, 1
      %s209 = scalar_select %p206, %s207, %s208
      %p212 = pneg %p206
      %p213 = scmp.eq.s32.totalorder %s29, 1
      %p214 = por %p212, %p213
      %p215 = scmp.ne.s32.totalorder %s207, %s210
      %p216 = scmp.eq.s32.totalorder %s29, 0
      %p217 = por %p215, %p216
      %p218 = scmp.ne.s32.totalorder %s207, %s210
      %p219 = scmp.eq.s32.totalorder %s34, 1
      %p220 = por %p218, %p219
      %p221 = scmp.ne.s32.totalorder %s210, %s211
      %p222 = scmp.eq.s32.totalorder %s34, 0
      %p223 = por %p221, %p222
      %p224 = scmp.ne.s32.totalorder %s210, %s211
      %p225 = scmp.eq.s32.totalorder %s35, 1
      %p226 = por %p224, %p225
      %p228 = scmp.ne.s32.totalorder %s211, %s227
      %p229 = scmp.eq.s32.totalorder %s35, 0
      %p230 = por %p228, %p229
      %s232 = sadd.s32 %s231, 1
      %p235 = scmp.eq.s32.totalorder %s29, 1
      %p236 = scmp.ne.s32.totalorder %s231, %s233
      %p237 = scmp.eq.s32.totalorder %s29, 0
      %p238 = por %p236, %p237
      %p239 = scmp.ne.s32.totalorder %s231, %s233
      %p240 = scmp.eq.s32.totalorder %s34, 1
      %p241 = por %p239, %p240
      %p242 = scmp.ne.s32.totalorder %s233, %s234
      %p243 = scmp.eq.s32.totalorder %s34, 0
      %p244 = por %p242, %p243
      %p245 = scmp.ne.s32.totalorder %s233, %s234
      %p246 = scmp.eq.s32.totalorder %s35, 1
      %p247 = por %p245, %p246
      %p249 = scmp.ne.s32.totalorder %s234, %s248
      %p250 = scmp.eq.s32.totalorder %s35, 0
      %p251 = por %p249, %p250
      %s253 = sadd.s32 %s252, 1
      %p256 = scmp.eq.s32.totalorder %s29, 1
      %p257 = scmp.ne.s32.totalorder %s252, %s254
      %p258 = scmp.eq.s32.totalorder %s29, 0
      %p259 = por %p257, %p258
      %p260 = scmp.ne.s32.totalorder %s252, %s254
      %p261 = scmp.eq.s32.totalorder %s34, 1
      %p262 = por %p260, %p261
      %p263 = scmp.ne.s32.totalorder %s254, %s255
      %p264 = scmp.eq.s32.totalorder %s34, 0
      %p265 = por %p263, %p264
      %p266 = scmp.ne.s32.totalorder %s254, %s255
      %p267 = scmp.eq.s32.totalorder %s35, 1
      %p268 = por %p266, %p267
      %p270 = scmp.ne.s32.totalorder %s255, %s269
      %p271 = scmp.eq.s32.totalorder %s35, 0
      %p272 = por %p270, %p271
      %s273 = ssub.s32 %s36, %s48
      %p274 = scmp.eq.s32.totalorder %s273, 0
      %s276 = sadd.s32 %s275, 1
      %s277 = scalar_select %p274, %s275, %s276
      %p280 = pneg %p274
      %p281 = scmp.eq.s32.totalorder %s29, 1
      %p282 = por %p280, %p281
      %p283 = scmp.ne.s32.totalorder %s275, %s278
      %p284 = scmp.eq.s32.totalorder %s29, 0
      %p285 = por %p283, %p284
      %p286 = scmp.ne.s32.totalorder %s275, %s278
      %p287 = scmp.eq.s32.totalorder %s34, 1
      %p288 = por %p286, %p287
      %p289 = scmp.ne.s32.totalorder %s278, %s279
      %p290 = scmp.eq.s32.totalorder %s34, 0
      %p291 = por %p289, %p290
      %p292 = scmp.ne.s32.totalorder %s278, %s279
      %p293 = scmp.eq.s32.totalorder %s35, 1
      %p294 = por %p292, %p293
      %p296 = scmp.ne.s32.totalorder %s279, %s295
      %p297 = scmp.eq.s32.totalorder %s35, 0
      %p298 = por %p296, %p297
      %s299 = ssub.s32 %s36, %s48
      %p300 = scmp.eq.s32.totalorder %s299, 0
      %s302 = sadd.s32 %s301, 1
      %s303 = scalar_select %p300, %s301, %s302
      %p306 = pneg %p300
      %p307 = scmp.eq.s32.totalorder %s29, 1
      %p308 = por %p306, %p307
      %p309 = scmp.ne.s32.totalorder %s301, %s304
      %p310 = scmp.eq.s32.totalorder %s29, 0
      %p311 = por %p309, %p310
      %p312 = scmp.ne.s32.totalorder %s301, %s304
      %p313 = scmp.eq.s32.totalorder %s34, 1
      %p314 = por %p312, %p313
      %p315 = scmp.ne.s32.totalorder %s304, %s305
      %p316 = scmp.eq.s32.totalorder %s34, 0
      %p317 = por %p315, %p316
      %p318 = scmp.ne.s32.totalorder %s304, %s305
      %p319 = scmp.eq.s32.totalorder %s35, 1
      %p320 = por %p318, %p319
      %p322 = scmp.ne.s32.totalorder %s305, %s321
      %p323 = scmp.eq.s32.totalorder %s35, 0
      %p324 = por %p322, %p323
      %s325 = ssub.s32 %s36, %s48
      %p326 = scmp.eq.s32.totalorder %s325, 0
      %s328 = sadd.s32 %s327, 1
      %s329 = scalar_select %p326, %s327, %s328
      %p332 = pneg %p326
      %p333 = scmp.eq.s32.totalorder %s29, 1
      %p334 = por %p332, %p333
      %p335 = scmp.ne.s32.totalorder %s327, %s330
      %p336 = scmp.eq.s32.totalorder %s29, 0
      %p337 = por %p335, %p336
      %p338 = scmp.ne.s32.totalorder %s327, %s330
      %p339 = scmp.eq.s32.totalorder %s34, 1
      %p340 = por %p338, %p339
      %p341 = scmp.ne.s32.totalorder %s330, %s331
      %p342 = scmp.eq.s32.totalorder %s34, 0
      %p343 = por %p341, %p342
      %p344 = scmp.ne.s32.totalorder %s330, %s331
      %p345 = scmp.eq.s32.totalorder %s35, 1
      %p346 = por %p344, %p345
      %p348 = scmp.ne.s32.totalorder %s331, %s347
      %p349 = scmp.eq.s32.totalorder %s35, 0
      %p350 = por %p348, %p349
      %s351 = ssub.s32 %s36, %s48
      %p352 = scmp.eq.s32.totalorder %s351, 0
      %s354 = sadd.s32 %s353, 1
      %s355 = scalar_select %p352, %s353, %s354
      %p358 = pneg %p352
      %p359 = scmp.eq.s32.totalorder %s29, 1
      %p360 = por %p358, %p359
      %p361 = scmp.ne.s32.totalorder %s353, %s356
      %p362 = scmp.eq.s32.totalorder %s29, 0
      %p363 = por %p361, %p362
      %p364 = scmp.ne.s32.totalorder %s353, %s356
      %p365 = scmp.eq.s32.totalorder %s34, 1
      %p366 = por %p364, %p365
      %p367 = scmp.ne.s32.totalorder %s356, %s357
      %p368 = scmp.eq.s32.totalorder %s34, 0
      %p369 = por %p367, %p368
      %p370 = scmp.ne.s32.totalorder %s356, %s357
      %p371 = scmp.eq.s32.totalorder %s35, 1
      %p372 = por %p370, %p371
      %p374 = scmp.ne.s32.totalorder %s357, %s373
      %p375 = scmp.eq.s32.totalorder %s35, 0
      %p376 = por %p374, %p375
      %p377 = scmp.le.s32.totalorder 1, %s29
      %p378 = scmp.lt.s32.totalorder %s29, 3
      %p379 = pnand %p377, %p378
      %p380 = pneg %p379
      // Predicated region
      $region9: #{tpu_custom_call.1} parent=5 // pred_check
        _
      $region10: #{tpu_custom_call.1} parent=5 // pred_check_branch
        %382 = sbr.rel (%p379) target = $region12
      $region11: #{tpu_custom_call.1} parent=5 // pred_region
        %s383 = ssub.s32 %s29, 1
        // Predicated region
        $region13: #{tpu_custom_call.1} parent=11 // pred_check
          %p384 = pneg %p67
        $region14: #{tpu_custom_call.1} parent=11 // pred_check_branch
          %386 = sbr.rel (%p384) target = $region16
        $region15: #{tpu_custom_call.1} parent=11 // pred_region
          %s387 = smul.u32 4, %s38
          %389 = vsyncadd [#allocation3], 0
          %s390 = smul.addr %s387, 8
          %s391 = scalar_lea.hbm %s0, %s390
          %s392 = sshll.u32 %s391, 4
          %s393 = int_to_ptr.hbm [resolvable:$true] %s392
          %s394 = sshll.u32 [#allocation2], 4
          %s395 = int_to_ptr.vmem [resolvable:$true] %s394
          %400 = dma.hbm_to_vmem [thread:$0]  %s393, 512, %s395, [#allocation3], 128, 128, 8
        $region16: #{tpu_custom_call.1} parent=11 // pred_fallthru
          _
        // Predicated region
        $region17: #{tpu_custom_call.1} parent=11 // pred_check
          %p401 = pneg %p244
        $region18: #{tpu_custom_call.1} parent=11 // pred_check_branch
          %403 = sbr.rel (%p401) target = $region20
        $region19: #{tpu_custom_call.1} parent=11 // pred_region
          _
        $region20: #{tpu_custom_call.1} parent=11 // pred_fallthru
          _
        // Predicated region
        $region21: #{tpu_custom_call.1} parent=11 // pred_check
          %p404 = pneg %p265
        $region22: #{tpu_custom_call.1} parent=11 // pred_check_branch
          %406 = sbr.rel (%p404) target = $region24
        $region23: #{tpu_custom_call.1} parent=11 // pred_region
          _
        $region24: #{tpu_custom_call.1} parent=11 // pred_fallthru
          _
      $region12: #{tpu_custom_call.1} parent=5 // pred_fallthru
        _
      %p407 = scmp.lt.s32.totalorder %s29, 2
      // Predicated region
      $region25: #{tpu_custom_call.1} parent=5 // pred_check
        %p408 = pneg %p407
      $region26: #{tpu_custom_call.1} parent=5 // pred_check_branch
        %410 = sbr.rel (%p408) target = $region28
      $region27: #{tpu_custom_call.1} parent=5 // pred_region
        // Predicated region
        $region29: #{tpu_custom_call.1} parent=27 // pred_check
          %p411 = pneg %p87
        $region30: #{tpu_custom_call.1} parent=27 // pred_check_branch
          %413 = sbr.rel (%p411) target = $region32
        $region31: #{tpu_custom_call.1} parent=27 // pred_region
          %s414 = sand.u32 %s29, 1
          %s415 = scalar_lea.sflag [#allocation6], %s414
          %s416 = sand.u32 %s77, 1
          %s417 = scalar_lea.vmem [#allocation5], %s416
          %419 = vsyncadd %s415, 0
          %s420 = scalar_lea.hbm %s1, %s37
          %s422 = sshll.u32 %s420, 4
          %s423 = int_to_ptr.hbm [resolvable:$true] %s422
          %s424 = sshll.u32 %s417, 4
          %s425 = int_to_ptr.vmem [resolvable:$true] %s424
          %427 = dma.hbm_to_vmem [thread:$0]  %s423, 16, %s425, %s415
        $region32: #{tpu_custom_call.1} parent=27 // pred_fallthru
          _
        // Predicated region
        $region33: #{tpu_custom_call.1} parent=27 // pred_check
          %p428 = pneg %p113
        $region34: #{tpu_custom_call.1} parent=27 // pred_check_branch
          %430 = sbr.rel (%p428) target = $region36
        $region35: #{tpu_custom_call.1} parent=27 // pred_region
          %s431 = sand.u32 %s29, 1
          %s432 = scalar_lea.sflag [#allocation6], %s431
          %s433 = sand.u32 %s103, 1
          %s434 = scalar_lea.vmem [#allocation7], %s433
          %436 = vsyncadd %s432, 0
          %s437 = scalar_lea.hbm %s2, %s37
          %s439 = sshll.u32 %s437, 4
          %s440 = int_to_ptr.hbm [resolvable:$true] %s439
          %s441 = sshll.u32 %s434, 4
          %s442 = int_to_ptr.vmem [resolvable:$true] %s441
          %444 = dma.hbm_to_vmem [thread:$0]  %s440, 16, %s442, %s432
        $region36: #{tpu_custom_call.1} parent=27 // pred_fallthru
          _
        // Predicated region
        $region37: #{tpu_custom_call.1} parent=27 // pred_check
          %p445 = pneg %p139
        $region38: #{tpu_custom_call.1} parent=27 // pred_check_branch
          %447 = sbr.rel (%p445) target = $region40
        $region39: #{tpu_custom_call.1} parent=27 // pred_region
          %s448 = sand.u32 %s29, 1
          %s449 = scalar_lea.sflag [#allocation9], %s448
          %s450 = sand.u32 %s129, 1
          %s451 = smul.addr %s450, 32
          %s452 = scalar_lea.vmem [#allocation8], %s451
          %454 = vsyncadd %s449, 0
          %s455 = smul.addr %s37, 4
          %s456 = smul.addr %s455, 8
          %s457 = scalar_lea.hbm %s3, %s456
          %s458 = sshll.u32 %s457, 4
          %s459 = int_to_ptr.hbm [resolvable:$true] %s458
          %s460 = sshll.u32 %s452, 4
          %s461 = int_to_ptr.vmem [resolvable:$true] %s460
          %466 = dma.hbm_to_vmem [thread:$0]  %s459, 512, %s461, %s449, 128, 128, 8
        $region40: #{tpu_custom_call.1} parent=27 // pred_fallthru
          _
        // Predicated region
        $region41: #{tpu_custom_call.1} parent=27 // pred_check
          %p467 = pneg %p165
        $region42: #{tpu_custom_call.1} parent=27 // pred_check_branch
          %469 = sbr.rel (%p467) target = $region44
        $region43: #{tpu_custom_call.1} parent=27 // pred_region
          %p470 = scmp.lt.s32.totalorder %s37, 1
          %s471 = scalar_select %p470, %s37, 1
          %s472 = scalar_lea.vmem %s4, %s471
        $region44: #{tpu_custom_call.1} parent=27 // pred_fallthru
          _
        // Predicated region
        $region45: #{tpu_custom_call.1} parent=27 // pred_check
          %p473 = pneg %p191
        $region46: #{tpu_custom_call.1} parent=27 // pred_check_branch
          %475 = sbr.rel (%p473) target = $region48
        $region47: #{tpu_custom_call.1} parent=27 // pred_region
          %s476 = sand.u32 %s29, 1
          %s477 = scalar_lea.sflag [#allocation9], %s476
          %s478 = sand.u32 %s181, 1
          %s479 = smul.addr %s478, 32
          %s480 = scalar_lea.vmem [#allocation10], %s479
          %482 = vsyncadd %s477, 0
          %s483 = smul.addr %s37, 4
          %s484 = smul.addr %s483, 8
          %s485 = scalar_lea.hbm %s5, %s484
          %s486 = sshll.u32 %s485, 4
          %s487 = int_to_ptr.hbm [resolvable:$true] %s486
          %s488 = sshll.u32 %s480, 4
          %s489 = int_to_ptr.vmem [resolvable:$true] %s488
          %494 = dma.hbm_to_vmem [thread:$0]  %s487, 512, %s489, %s477, 128, 128, 8
        $region48: #{tpu_custom_call.1} parent=27 // pred_fallthru
          _
        // Predicated region
        $region49: #{tpu_custom_call.1} parent=27 // pred_check
          %p495 = pneg %p217
        $region50: #{tpu_custom_call.1} parent=27 // pred_check_branch
          %497 = sbr.rel (%p495) target = $region52
        $region51: #{tpu_custom_call.1} parent=27 // pred_region
          %p498 = scmp.lt.s32.totalorder %s37, 1
          %s499 = scalar_select %p498, %s37, 1
          %s500 = scalar_lea.vmem %s6, %s499
        $region52: #{tpu_custom_call.1} parent=27 // pred_fallthru
          _
      $region28: #{tpu_custom_call.1} parent=5 // pred_fallthru
        _
      %p501 = scmp.le.s32.totalorder 1, %s29
      %p502 = scmp.lt.s32.totalorder %s29, 3
      %p503 = pnand %p501, %p502
      %p504 = pneg %p503
      // Predicated region
      $region53: #{tpu_custom_call.1} parent=5 // pred_check
        _
      $region54: #{tpu_custom_call.1} parent=5 // pred_check_branch
        %506 = sbr.rel (%p503) target = $region56
      $region55: #{tpu_custom_call.1} parent=5 // pred_region
        %s507 = ssub.s32 %s29, 1
        // Predicated region
        $region57: #{tpu_custom_call.1} parent=55 // pred_check
          %p508 = pneg %p67
        $region58: #{tpu_custom_call.1} parent=55 // pred_check_branch
          %510 = sbr.rel (%p508) target = $region60
        $region59: #{tpu_custom_call.1} parent=55 // pred_region
          %512 = dma.done [#allocation3], 512
        $region60: #{tpu_custom_call.1} parent=55 // pred_fallthru
          _
        %s513 = sand.u32 %s34, 1
        %s514 = scalar_lea.sflag [#allocation6], %s513
        %s515 = sand.u32 %s80, 1
        %s516 = scalar_lea.vmem [#allocation5], %s515
        // Predicated region
        $region61: #{tpu_custom_call.1} parent=55 // pred_check
          %p517 = pneg %p93
        $region62: #{tpu_custom_call.1} parent=55 // pred_check_branch
          %519 = sbr.rel (%p517) target = $region64
        $region63: #{tpu_custom_call.1} parent=55 // pred_region
          %521 = dma.done %s514, 16
        $region64: #{tpu_custom_call.1} parent=55 // pred_fallthru
          _
        %s522 = sand.u32 %s34, 1
        %s523 = scalar_lea.sflag [#allocation6], %s522
        %s524 = sand.u32 %s106, 1
        %s525 = scalar_lea.vmem [#allocation7], %s524
        // Predicated region
        $region65: #{tpu_custom_call.1} parent=55 // pred_check
          %p526 = pneg %p119
        $region66: #{tpu_custom_call.1} parent=55 // pred_check_branch
          %528 = sbr.rel (%p526) target = $region68
        $region67: #{tpu_custom_call.1} parent=55 // pred_region
          %530 = dma.done %s523, 16
        $region68: #{tpu_custom_call.1} parent=55 // pred_fallthru
          _
        %s531 = sand.u32 %s34, 1
        %s532 = scalar_lea.sflag [#allocation9], %s531
        %s533 = sand.u32 %s132, 1
        %s534 = smul.addr %s533, 32
        %s535 = scalar_lea.vmem [#allocation8], %s534
        // Predicated region
        $region69: #{tpu_custom_call.1} parent=55 // pred_check
          %p536 = pneg %p145
        $region70: #{tpu_custom_call.1} parent=55 // pred_check_branch
          %538 = sbr.rel (%p536) target = $region72
        $region71: #{tpu_custom_call.1} parent=55 // pred_region
          %540 = dma.done %s532, 512
        $region72: #{tpu_custom_call.1} parent=55 // pred_fallthru
          _
        %s541 = sand.u32 %s34, 1
        %s542 = scalar_lea.sflag [#allocation9], %s541
        %s543 = sand.u32 %s184, 1
        %s544 = smul.addr %s543, 32
        %s545 = scalar_lea.vmem [#allocation10], %s544
        // Predicated region
        $region73: #{tpu_custom_call.1} parent=55 // pred_check
          %p546 = pneg %p197
        $region74: #{tpu_custom_call.1} parent=55 // pred_check_branch
          %548 = sbr.rel (%p546) target = $region76
        $region75: #{tpu_custom_call.1} parent=55 // pred_region
          %550 = dma.done %s542, 512
        $region76: #{tpu_custom_call.1} parent=55 // pred_fallthru
          _
        %p551 = pneg %p67
        %p552 = pneg %p64
        %s553 = sand.u32 %s34, 1
        %s554 = scalar_lea.sflag [#allocation6], %s553
        %s555 = sand.u32 %s80, 1
        %s556 = scalar_lea.vmem [#allocation5], %s555
        %p557 = pneg %p93
        %p558 = pneg %p90
        %s559 = sand.u32 %s34, 1
        %s560 = scalar_lea.sflag [#allocation6], %s559
        %s561 = sand.u32 %s106, 1
        %s562 = scalar_lea.vmem [#allocation7], %s561
        %p563 = pneg %p119
        %p564 = pneg %p116
        %s565 = sand.u32 %s34, 1
        %s566 = scalar_lea.sflag [#allocation9], %s565
        %s567 = sand.u32 %s132, 1
        %s568 = smul.addr %s567, 32
        %s569 = scalar_lea.vmem [#allocation8], %s568
        %p570 = pneg %p145
        %p571 = pneg %p142
        %p572 = scmp.lt.s32.totalorder %s39, 1
        %s573 = scalar_select %p572, %s39, 1
        %s574 = scalar_lea.vmem %s4, %s573
        %p575 = pneg %p171
        %p576 = pneg %p168
        %s577 = sand.u32 %s34, 1
        %s578 = scalar_lea.sflag [#allocation9], %s577
        %s579 = sand.u32 %s184, 1
        %s580 = smul.addr %s579, 32
        %s581 = scalar_lea.vmem [#allocation10], %s580
        %p582 = pneg %p197
        %p583 = pneg %p194
        %p584 = scmp.lt.s32.totalorder %s39, 1
        %s585 = scalar_select %p584, %s39, 1
        %s586 = scalar_lea.vmem %s6, %s585
        %p587 = pneg %p223
        %p588 = pneg %p220
        %p589 = pneg %p244
        %p590 = pneg %p241
        %p591 = pneg %p265
        %p592 = pneg %p262
        %p593 = pneg %p291
        %p594 = pneg %p288
        %p595 = pneg %p317
        %p596 = pneg %p314
        %p597 = pneg %p343
        %p598 = pneg %p340
        %p599 = pneg %p369
        %p600 = pneg %p366
        %s601 = smul.u32 4, %s38
        %p602 = scmp.lt.s32.totalorder %s39, 1
        %s603 = scalar_select %p602, %s39, 1
        %s604 = scalar_lea.vmem %s4, %s603
        %p605 = scmp.lt.s32.totalorder %s39, 1
        %s606 = scalar_select %p605, %s39, 1
        %s607 = scalar_lea.vmem %s6, %s606
        %s608 = smul.u32 4, %s38
        %s609 = smul.u32 4, %s38
        %s610 = smul.u32 4, %s38
        %s611 = smul.u32 4, %s38
        %p612 = scmp.eq.s32.totalorder %s39, 0
        // Predicated region
        $region77: #{tpu_custom_call.1} parent=55 // pred_check
          %p613 = pneg %p612
        $region78: #{tpu_custom_call.1} parent=55 // pred_check_branch
          %615 = sbr.rel (%p613) target = $region80
        $region79: #{tpu_custom_call.1} parent=55 // pred_region
          %v616 = vld [vmem:[#allocation2] sm:$0xff]
          %v617 = vld [vmem:[#allocation2 + $0x8] sm:$0xff]
          %v618 = vld [vmem:[#allocation2 + $0x10] sm:$0xff]
          %v619 = vld [vmem:[#allocation2 + $0x18] sm:$0xff]
          %vm620 = vcmask 261120
          %621 = vst.msk [vmem:[#allocation11] sm:$0xff] %vm620, %v616
          %622 = vst.msk [vmem:[#allocation11 + $0x8] sm:$0xff] %vm620, %v617
          %623 = vst.msk [vmem:[#allocation11 + $0x10] sm:$0xff] %vm620, %v618
          %624 = vst.msk [vmem:[#allocation11 + $0x18] sm:$0xff] %vm620, %v619
        $region80: #{tpu_custom_call.1} parent=55 // pred_fallthru
          _
        %v625 = vld [vmem:[#allocation11] sm:$0xff]
        %v626 = vld [vmem:[#allocation11 + $0x8] sm:$0xff]
        %v627 = vld [vmem:[#allocation11 + $0x10] sm:$0xff]
        %v628 = vld [vmem:[#allocation11 + $0x18] sm:$0xff]
        %vm629 = vcmask 261120
        %v630 = vsel %vm629, %v625, 0.0
        %631 = vadd.xlane.f32.xlu0 %v630
        %v632 = vpop.xlane.xlu0 %631
        %v633 = vsel %vm629, %v626, 0.0
        %634 = vadd.xlane.f32.xlu0 %v633
        %v635 = vpop.xlane.xlu0 %634
        %v636 = vsel %vm629, %v627, 0.0
        %637 = vadd.xlane.f32.xlu0 %v636
        %v638 = vpop.xlane.xlu0 %637
        %v639 = vsel %vm629, %v628, 0.0
        %640 = vadd.xlane.f32.xlu0 %v639
        %v641 = vpop.xlane.xlu0 %640
        %v642 = vrcp.pop 32.0
        %v643 = vmul.f32 32.0, %v642
        %v644 = vsub.f32 1.0, %v643
        %v645 = vmul.f32 %v642, %v644
        %v646 = vadd.f32 %v642, %v645
        %vm647 = vweird.f32 %v642
        %v648 = vsel %vm647, %v642, %v646
        %v649 = vmul.f32 %v632, %v648
        %v650 = vmul.f32 %v635, %v648
        %v651 = vmul.f32 %v638, %v648
        %v652 = vmul.f32 %v641, %v648
        %v653 = vsub.f32 %v625, %v649
        %v654 = vsub.f32 %v626, %v650
        %v655 = vsub.f32 %v627, %v651
        %v656 = vsub.f32 %v628, %v652
        %v657 = vmul.f32 %v653, %v653
        %v658 = vmul.f32 %v654, %v654
        %v659 = vmul.f32 %v655, %v655
        %v660 = vmul.f32 %v656, %v656
        %v661 = vsel %vm629, %v657, 0.0
        %662 = vadd.xlane.f32.xlu0 %v661
        %v663 = vpop.xlane.xlu0 %662
        %v664 = vsel %vm629, %v658, 0.0
        %665 = vadd.xlane.f32.xlu0 %v664
        %v666 = vpop.xlane.xlu0 %665
        %v667 = vsel %vm629, %v659, 0.0
        %668 = vadd.xlane.f32.xlu0 %v667
        %v669 = vpop.xlane.xlu0 %668
        %v670 = vsel %vm629, %v660, 0.0
        %671 = vadd.xlane.f32.xlu0 %v670
        %v672 = vpop.xlane.xlu0 %671
        %v673 = vmul.f32 %v663, %v648
        %v674 = vmul.f32 %v666, %v648
        %v675 = vmul.f32 %v669, %v648
        %v676 = vmul.f32 %v672, %v648
        %v677 = vadd.f32 %v673, 1e-05
        %v678 = vadd.f32 %v674, 1e-05
        %v679 = vadd.f32 %v675, 1e-05
        %v680 = vadd.f32 %v676, 1e-05
        %v681 = vrsqrt.pop %v677
        %v682 = vmul.f32 %v681, %v677
        %v683 = vmul.f32 %v682, %v681
        %v684 = vmul.f32 0.5, %v683
        %v685 = vsub.f32 1.5, %v684
        %v686 = vmul.f32 %v681, %v685
        %vm687 = vweird.f32 %v677
        %vm688 = vweird.f32 %v681
        %vm689 = vmor %vm687, %vm688
        %v690 = vsel %vm689, %v681, %v686
        %v691 = vrsqrt.pop %v678
        %v692 = vmul.f32 %v691, %v678
        %v693 = vmul.f32 %v692, %v691
        %v694 = vmul.f32 0.5, %v693
        %v695 = vsub.f32 1.5, %v694
        %v696 = vmul.f32 %v691, %v695
        %vm697 = vweird.f32 %v678
        %vm698 = vweird.f32 %v691
        %vm699 = vmor %vm697, %vm698
        %v700 = vsel %vm699, %v691, %v696
        %v701 = vrsqrt.pop %v679
        %v702 = vmul.f32 %v701, %v679
        %v703 = vmul.f32 %v702, %v701
        %v704 = vmul.f32 0.5, %v703
        %v705 = vsub.f32 1.5, %v704
        %v706 = vmul.f32 %v701, %v705
        %vm707 = vweird.f32 %v679
        %vm708 = vweird.f32 %v701
        %vm709 = vmor %vm707, %vm708
        %v710 = vsel %vm709, %v701, %v706
        %v711 = vrsqrt.pop %v680
        %v712 = vmul.f32 %v711, %v680
        %v713 = vmul.f32 %v712, %v711
        %v714 = vmul.f32 0.5, %v713
        %v715 = vsub.f32 1.5, %v714
        %v716 = vmul.f32 %v711, %v715
        %vm717 = vweird.f32 %v680
        %vm718 = vweird.f32 %v711
        %vm719 = vmor %vm717, %vm718
        %v720 = vsel %vm719, %v711, %v716
        %v721 = vmul.f32 %v653, %v690
        %v722 = vmul.f32 %v654, %v700
        %v723 = vmul.f32 %v655, %v710
        %v724 = vmul.f32 %v656, %v720
        %v725 = vld [vmem:[%s516] sm:$0x1]
        %v727 = vperm.slane %v725, 0
        %v729 = vmul.f32 %v721, %v727
        %v730 = vmul.f32 %v722, %v727
        %v731 = vmul.f32 %v723, %v727
        %v732 = vmul.f32 %v724, %v727
        %v733 = vld [vmem:[%s525] sm:$0x1]
        %v735 = vperm.slane %v733, 0
        %v737 = vadd.f32 %v729, %v735
        %v738 = vadd.f32 %v730, %v735
        %v739 = vadd.f32 %v731, %v735
        %v740 = vadd.f32 %v732, %v735
        %v741 = vld [vmem:[%s535] sm:$0xff]
        %v742 = vld [vmem:[%s535 + $0x8] sm:$0xff]
        %v743 = vld [vmem:[%s535 + $0x10] sm:$0xff]
        %v744 = vld [vmem:[%s535 + $0x18] sm:$0xff]
        %v745 = vld [vmem:[%s604] sm:$0x1]
        %v747 = vperm.slane %v745, 0
        %v750 = vsel %vm629, %v737, 0
        %v753 = vsel %vm629, %v738, 0
        %v756 = vsel %vm629, %v739, 0
        %v759 = vsel %vm629, %v740, 0
        %761 = vmatpush.msra.mxu0 0.0
        %762 = vmatpush.msra.mxu0 0.0
        %763 = vmatpush.msra.mxu0 0.0
        %764 = vmatpush.msra.mxu0 0.0
        %765 = vmatpush.msra.mxu0 0.0
        %766 = vmatpush.msra.mxu0 0.0
        %767 = vmatpush.msra.mxu0 0.0
        %768 = vmatpush.msra.mxu0 0.0
        %769 = vmatpush.msra.mxu0 0.0
        %770 = vmatpush.msra.mxu0 0.0
        %771 = vmatpush.msra.mxu0 0.0
        %772 = vmatpush.msra.mxu0 0.0
        %773 = vmatpush.msra.mxu0 %v744
        %774 = vmatpush.msra.mxu0 %v743
        %775 = vmatpush.msra.mxu0 %v742
        %776 = vmatpush.msra.mxu0 %v741
        %777 = vmatmul.f32.gmra.mxu0 %v750
        %v778 = vpop.f32.mrf.mxu0
        %v779 = vadd.f32 %v747, %v778
        %780 = vmatmul.f32.gmra.mxu0 %v753
        %v781 = vpop.f32.mrf.mxu0
        %v782 = vadd.f32 %v747, %v781
        %783 = vmatmul.f32.gmra.mxu0 %v756
        %v784 = vpop.f32.mrf.mxu0
        %v785 = vadd.f32 %v747, %v784
        %786 = vmatmul.f32.gmra.mxu0 %v759
        %v787 = vpop.f32.mrf.mxu0
        %v788 = vadd.f32 %v747, %v787
        %789 = vdwg.mxu0
        %794 = vrot.lane.b32.xlu0 %v779, 120
        %v795 = vpop.permute.xlu0 %794
        %796 = vrot.lane.b32.xlu0 %v782, 120
        %v797 = vpop.permute.xlu0 %796
        %798 = vrot.lane.b32.xlu0 %v785, 120
        %v799 = vpop.permute.xlu0 %798
        %800 = vrot.lane.b32.xlu0 %v788, 120
        %v801 = vpop.permute.xlu0 %800
        %802 = vrot.lane.b32.xlu0 %v779, 112
        %v803 = vpop.permute.xlu0 %802
        %804 = vrot.lane.b32.xlu0 %v782, 112
        %v805 = vpop.permute.xlu0 %804
        %806 = vrot.lane.b32.xlu0 %v785, 112
        %v807 = vpop.permute.xlu0 %806
        %808 = vrot.lane.b32.xlu0 %v788, 112
        %v809 = vpop.permute.xlu0 %808
        %810 = vrot.lane.b32.xlu0 %v779, 104
        %v811 = vpop.permute.xlu0 %810
        %812 = vrot.lane.b32.xlu0 %v782, 104
        %v813 = vpop.permute.xlu0 %812
        %814 = vrot.lane.b32.xlu0 %v785, 104
        %v815 = vpop.permute.xlu0 %814
        %816 = vrot.lane.b32.xlu0 %v788, 104
        %v817 = vpop.permute.xlu0 %816
        %818 = vrot.lane.b32.xlu0 %v779, 96
        %v819 = vpop.permute.xlu0 %818
        %820 = vrot.lane.b32.xlu0 %v782, 96
        %v821 = vpop.permute.xlu0 %820
        %vm822 = vcmask 64512
        %v823 = vsel %vm822, %v779, 0
        %v825 = vsel %vm822, %v782, 0
        %v827 = vsel %vm822, %v819, 0
        %v829 = vsel %vm822, %v821, 0
        %831 = vmatpush.xpose.msra.mxu0 0.0
        %832 = vmatpush.xpose.msra.mxu0 0.0
        %833 = vmatpush.xpose.msra.mxu0 0.0
        %834 = vmatpush.xpose.msra.mxu0 0.0
        %835 = vmatpush.xpose.msra.mxu0 0.0
        %836 = vmatpush.xpose.msra.mxu0 0.0
        %837 = vmatpush.xpose.msra.mxu0 0.0
        %838 = vmatpush.xpose.msra.mxu0 0.0
        %839 = vmatpush.xpose.msra.mxu0 0.0
        %840 = vmatpush.xpose.msra.mxu0 0.0
        %841 = vmatpush.xpose.msra.mxu0 0.0
        %842 = vmatpush.xpose.msra.mxu0 0.0
        %843 = vmatpush.xpose.msra.mxu0 0.0
        %844 = vmatpush.xpose.msra.mxu0 0.0
        %845 = vmatpush.xpose.msra.mxu0 %v829
        %846 = vmatpush.xpose.msra.mxu0 %v827
        %847 = vmatmul.f32.gmra.mxu0 %v823
        %v848 = vpop.f32.mrf.mxu0
        %v849 = vadd.f32 0.0, %v848
        %850 = vmatmul.f32.gmra.mxu0 %v825
        %v851 = vpop.f32.mrf.mxu0
        %v852 = vadd.f32 0.0, %v851
        %853 = vdwg.mxu0
        %854 = vrot.lane.b32.xlu0 %v785, 96
        %v855 = vpop.permute.xlu0 %854
        %856 = vrot.lane.b32.xlu0 %v788, 96
        %v857 = vpop.permute.xlu0 %856
        %v858 = vsel %vm822, %v785, 0
        %v860 = vsel %vm822, %v788, 0
        %v862 = vsel %vm822, %v855, 0
        %v864 = vsel %vm822, %v857, 0
        %866 = vmatpush.xpose.msra.mxu0 0.0
        %867 = vmatpush.xpose.msra.mxu0 0.0
        %868 = vmatpush.xpose.msra.mxu0 0.0
        %869 = vmatpush.xpose.msra.mxu0 0.0
        %870 = vmatpush.xpose.msra.mxu0 0.0
        %871 = vmatpush.xpose.msra.mxu0 0.0
        %872 = vmatpush.xpose.msra.mxu0 0.0
        %873 = vmatpush.xpose.msra.mxu0 0.0
        %874 = vmatpush.xpose.msra.mxu0 0.0
        %875 = vmatpush.xpose.msra.mxu0 0.0
        %876 = vmatpush.xpose.msra.mxu0 0.0
        %877 = vmatpush.xpose.msra.mxu0 0.0
        %878 = vmatpush.xpose.msra.mxu0 0.0
        %879 = vmatpush.xpose.msra.mxu0 0.0
        %880 = vmatpush.xpose.msra.mxu0 %v864
        %881 = vmatpush.xpose.msra.mxu0 %v862
        %882 = vmatmul.f32.gmra.mxu0 %v858
        %v883 = vpop.f32.mrf.mxu0
        %v884 = vadd.f32 0.0, %v883
        %885 = vmatmul.f32.gmra.mxu0 %v860
        %v886 = vpop.f32.mrf.mxu0
        %v887 = vadd.f32 0.0, %v886
        %888 = vdwg.mxu0
        %889 = vrot.lane.b32.xlu0 %v795, 96
        %v890 = vpop.permute.xlu0 %889
        %891 = vrot.lane.b32.xlu0 %v797, 96
        %v892 = vpop.permute.xlu0 %891
        %v893 = vsel %vm822, %v795, 0
        %v895 = vsel %vm822, %v797, 0
        %v897 = vsel %vm822, %v890, 0
        %v899 = vsel %vm822, %v892, 0
        %901 = vmatpush.xpose.msra.mxu0 0.0
        %902 = vmatpush.xpose.msra.mxu0 0.0
        %903 = vmatpush.xpose.msra.mxu0 0.0
        %904 = vmatpush.xpose.msra.mxu0 0.0
        %905 = vmatpush.xpose.msra.mxu0 0.0
        %906 = vmatpush.xpose.msra.mxu0 0.0
        %907 = vmatpush.xpose.msra.mxu0 0.0
        %908 = vmatpush.xpose.msra.mxu0 0.0
        %909 = vmatpush.xpose.msra.mxu0 0.0
        %910 = vmatpush.xpose.msra.mxu0 0.0
        %911 = vmatpush.xpose.msra.mxu0 0.0
        %912 = vmatpush.xpose.msra.mxu0 0.0
        %913 = vmatpush.xpose.msra.mxu0 0.0
        %914 = vmatpush.xpose.msra.mxu0 0.0
        %915 = vmatpush.xpose.msra.mxu0 %v899
        %916 = vmatpush.xpose.msra.mxu0 %v897
        %917 = vmatmul.f32.gmra.mxu0 %v893
        %v918 = vpop.f32.mrf.mxu0
        %v919 = vadd.f32 0.0, %v918
        %920 = vmatmul.f32.gmra.mxu0 %v895
        %v921 = vpop.f32.mrf.mxu0
        %v922 = vadd.f32 0.0, %v921
        %923 = vdwg.mxu0
        %924 = vrot.lane.b32.xlu0 %v799, 96
        %v925 = vpop.permute.xlu0 %924
        %926 = vrot.lane.b32.xlu0 %v801, 96
        %v927 = vpop.permute.xlu0 %926
        %v928 = vsel %vm822, %v799, 0
        %v930 = vsel %vm822, %v801, 0
        %v932 = vsel %vm822, %v925, 0
        %v934 = vsel %vm822, %v927, 0
        %936 = vmatpush.xpose.msra.mxu0 0.0
        %937 = vmatpush.xpose.msra.mxu0 0.0
        %938 = vmatpush.xpose.msra.mxu0 0.0
        %939 = vmatpush.xpose.msra.mxu0 0.0
        %940 = vmatpush.xpose.msra.mxu0 0.0
        %941 = vmatpush.xpose.msra.mxu0 0.0
        %942 = vmatpush.xpose.msra.mxu0 0.0
        %943 = vmatpush.xpose.msra.mxu0 0.0
        %944 = vmatpush.xpose.msra.mxu0 0.0
        %945 = vmatpush.xpose.msra.mxu0 0.0
        %946 = vmatpush.xpose.msra.mxu0 0.0
        %947 = vmatpush.xpose.msra.mxu0 0.0
        %948 = vmatpush.xpose.msra.mxu0 0.0
        %949 = vmatpush.xpose.msra.mxu0 0.0
        %950 = vmatpush.xpose.msra.mxu0 %v934
        %951 = vmatpush.xpose.msra.mxu0 %v932
        %952 = vmatmul.f32.gmra.mxu0 %v928
        %v953 = vpop.f32.mrf.mxu0
        %v954 = vadd.f32 0.0, %v953
        %955 = vmatmul.f32.gmra.mxu0 %v930
        %v956 = vpop.f32.mrf.mxu0
        %v957 = vadd.f32 0.0, %v956
        %958 = vdwg.mxu0
        %959 = vrot.lane.b32.xlu0 %v803, 96
        %v960 = vpop.permute.xlu0 %959
        %961 = vrot.lane.b32.xlu0 %v805, 96
        %v962 = vpop.permute.xlu0 %961
        %v963 = vsel %vm822, %v803, 0
        %v965 = vsel %vm822, %v805, 0
        %v967 = vsel %vm822, %v960, 0
        %v969 = vsel %vm822, %v962, 0
        %971 = vmatpush.xpose.msra.mxu0 0.0
        %972 = vmatpush.xpose.msra.mxu0 0.0
        %973 = vmatpush.xpose.msra.mxu0 0.0
        %974 = vmatpush.xpose.msra.mxu0 0.0
        %975 = vmatpush.xpose.msra.mxu0 0.0
        %976 = vmatpush.xpose.msra.mxu0 0.0
        %977 = vmatpush.xpose.msra.mxu0 0.0
        %978 = vmatpush.xpose.msra.mxu0 0.0
        %979 = vmatpush.xpose.msra.mxu0 0.0
        %980 = vmatpush.xpose.msra.mxu0 0.0
        %981 = vmatpush.xpose.msra.mxu0 0.0
        %982 = vmatpush.xpose.msra.mxu0 0.0
        %983 = vmatpush.xpose.msra.mxu0 0.0
        %984 = vmatpush.xpose.msra.mxu0 0.0
        %985 = vmatpush.xpose.msra.mxu0 %v969
        %986 = vmatpush.xpose.msra.mxu0 %v967
        %987 = vmatmul.f32.gmra.mxu0 %v963
        %v988 = vpop.f32.mrf.mxu0
        %v989 = vadd.f32 0.0, %v988
        %990 = vmatmul.f32.gmra.mxu0 %v965
        %v991 = vpop.f32.mrf.mxu0
        %v992 = vadd.f32 0.0, %v991
        %993 = vdwg.mxu0
        %994 = vrot.lane.b32.xlu0 %v807, 96
        %v995 = vpop.permute.xlu0 %994
        %996 = vrot.lane.b32.xlu0 %v809, 96
        %v997 = vpop.permute.xlu0 %996
        %v998 = vsel %vm822, %v807, 0
        %v1000 = vsel %vm822, %v809, 0
        %v1002 = vsel %vm822, %v995, 0
        %v1004 = vsel %vm822, %v997, 0
        %1006 = vmatpush.xpose.msra.mxu0 0.0
        %1007 = vmatpush.xpose.msra.mxu0 0.0
        %1008 = vmatpush.xpose.msra.mxu0 0.0
        %1009 = vmatpush.xpose.msra.mxu0 0.0
        %1010 = vmatpush.xpose.msra.mxu0 0.0
        %1011 = vmatpush.xpose.msra.mxu0 0.0
        %1012 = vmatpush.xpose.msra.mxu0 0.0
        %1013 = vmatpush.xpose.msra.mxu0 0.0
        %1014 = vmatpush.xpose.msra.mxu0 0.0
        %1015 = vmatpush.xpose.msra.mxu0 0.0
        %1016 = vmatpush.xpose.msra.mxu0 0.0
        %1017 = vmatpush.xpose.msra.mxu0 0.0
        %1018 = vmatpush.xpose.msra.mxu0 0.0
        %1019 = vmatpush.xpose.msra.mxu0 0.0
        %1020 = vmatpush.xpose.msra.mxu0 %v1004
        %1021 = vmatpush.xpose.msra.mxu0 %v1002
        %1022 = vmatmul.f32.gmra.mxu0 %v998
        %v1023 = vpop.f32.mrf.mxu0
        %v1024 = vadd.f32 0.0, %v1023
        %1025 = vmatmul.f32.gmra.mxu0 %v1000
        %v1026 = vpop.f32.mrf.mxu0
        %v1027 = vadd.f32 0.0, %v1026
        %1028 = vdwg.mxu0
        %1029 = vrot.lane.b32.xlu0 %v811, 96
        %v1030 = vpop.permute.xlu0 %1029
        %1031 = vrot.lane.b32.xlu0 %v813, 96
        %v1032 = vpop.permute.xlu0 %1031
        %v1033 = vsel %vm822, %v811, 0
        %v1035 = vsel %vm822, %v813, 0
        %v1037 = vsel %vm822, %v1030, 0
        %v1039 = vsel %vm822, %v1032, 0
        %1041 = vmatpush.xpose.msra.mxu0 0.0
        %1042 = vmatpush.xpose.msra.mxu0 0.0
        %1043 = vmatpush.xpose.msra.mxu0 0.0
        %1044 = vmatpush.xpose.msra.mxu0 0.0
        %1045 = vmatpush.xpose.msra.mxu0 0.0
        %1046 = vmatpush.xpose.msra.mxu0 0.0
        %1047 = vmatpush.xpose.msra.mxu0 0.0
        %1048 = vmatpush.xpose.msra.mxu0 0.0
        %1049 = vmatpush.xpose.msra.mxu0 0.0
        %1050 = vmatpush.xpose.msra.mxu0 0.0
        %1051 = vmatpush.xpose.msra.mxu0 0.0
        %1052 = vmatpush.xpose.msra.mxu0 0.0
        %1053 = vmatpush.xpose.msra.mxu0 0.0
        %1054 = vmatpush.xpose.msra.mxu0 0.0
        %1055 = vmatpush.xpose.msra.mxu0 %v1039
        %1056 = vmatpush.xpose.msra.mxu0 %v1037
        %1057 = vmatmul.f32.gmra.mxu0 %v1033
        %v1058 = vpop.f32.mrf.mxu0
        %v1059 = vadd.f32 0.0, %v1058
        %1060 = vmatmul.f32.gmra.mxu0 %v1035
        %v1061 = vpop.f32.mrf.mxu0
        %v1062 = vadd.f32 0.0, %v1061
        %1063 = vdwg.mxu0
        %1064 = vrot.lane.b32.xlu0 %v815, 96
        %v1065 = vpop.permute.xlu0 %1064
        %1066 = vrot.lane.b32.xlu0 %v817, 96
        %v1067 = vpop.permute.xlu0 %1066
        %v1068 = vsel %vm822, %v815, 0
        %v1070 = vsel %vm822, %v817, 0
        %v1072 = vsel %vm822, %v1065, 0
        %v1074 = vsel %vm822, %v1067, 0
        %1076 = vmatpush.xpose.msra.mxu0 0.0
        %1077 = vmatpush.xpose.msra.mxu0 0.0
        %1078 = vmatpush.xpose.msra.mxu0 0.0
        %1079 = vmatpush.xpose.msra.mxu0 0.0
        %1080 = vmatpush.xpose.msra.mxu0 0.0
        %1081 = vmatpush.xpose.msra.mxu0 0.0
        %1082 = vmatpush.xpose.msra.mxu0 0.0
        %1083 = vmatpush.xpose.msra.mxu0 0.0
        %1084 = vmatpush.xpose.msra.mxu0 0.0
        %1085 = vmatpush.xpose.msra.mxu0 0.0
        %1086 = vmatpush.xpose.msra.mxu0 0.0
        %1087 = vmatpush.xpose.msra.mxu0 0.0
        %1088 = vmatpush.xpose.msra.mxu0 0.0
        %1089 = vmatpush.xpose.msra.mxu0 0.0
        %1090 = vmatpush.xpose.msra.mxu0 %v1074
        %1091 = vmatpush.xpose.msra.mxu0 %v1072
        %1092 = vmatmul.f32.gmra.mxu0 %v1068
        %v1093 = vpop.f32.mrf.mxu0
        %v1094 = vadd.f32 0.0, %v1093
        %1095 = vmatmul.f32.gmra.mxu0 %v1070
        %v1096 = vpop.f32.mrf.mxu0
        %v1097 = vadd.f32 0.0, %v1096
        %1098 = vdwg.mxu0
        %vm1099 = vcmask 130048
        %v1100 = vsel %vm1099, %v849, -inf
        %1101 = vmax.xlane.f32.xlu0 %v1100
        %v1102 = vpop.xlane.xlu0 %1101
        %v1103 = vsel %vm1099, %v852, -inf
        %1104 = vmax.xlane.f32.xlu0 %v1103
        %v1105 = vpop.xlane.xlu0 %1104
        %v1106 = vsel %vm1099, %v884, -inf
        %1107 = vmax.xlane.f32.xlu0 %v1106
        %v1108 = vpop.xlane.xlu0 %1107
        %v1109 = vsel %vm1099, %v887, -inf
        %1110 = vmax.xlane.f32.xlu0 %v1109
        %v1111 = vpop.xlane.xlu0 %1110
        %v1112 = vsel %vm1099, %v919, -inf
        %1113 = vmax.xlane.f32.xlu0 %v1112
        %v1114 = vpop.xlane.xlu0 %1113
        %v1115 = vsel %vm1099, %v922, -inf
        %1116 = vmax.xlane.f32.xlu0 %v1115
        %v1117 = vpop.xlane.xlu0 %1116
        %v1118 = vsel %vm1099, %v954, -inf
        %1119 = vmax.xlane.f32.xlu0 %v1118
        %v1120 = vpop.xlane.xlu0 %1119
        %v1121 = vsel %vm1099, %v957, -inf
        %1122 = vmax.xlane.f32.xlu0 %v1121
        %v1123 = vpop.xlane.xlu0 %1122
        %v1124 = vsel %vm1099, %v989, -inf
        %1125 = vmax.xlane.f32.xlu0 %v1124
        %v1126 = vpop.xlane.xlu0 %1125
        %v1127 = vsel %vm1099, %v992, -inf
        %1128 = vmax.xlane.f32.xlu0 %v1127
        %v1129 = vpop.xlane.xlu0 %1128
        %v1130 = vsel %vm1099, %v1024, -inf
        %1131 = vmax.xlane.f32.xlu0 %v1130
        %v1132 = vpop.xlane.xlu0 %1131
        %v1133 = vsel %vm1099, %v1027, -inf
        %1134 = vmax.xlane.f32.xlu0 %v1133
        %v1135 = vpop.xlane.xlu0 %1134
        %v1136 = vsel %vm1099, %v1059, -inf
        %1137 = vmax.xlane.f32.xlu0 %v1136
        %v1138 = vpop.xlane.xlu0 %1137
        %v1139 = vsel %vm1099, %v1062, -inf
        %1140 = vmax.xlane.f32.xlu0 %v1139
        %v1141 = vpop.xlane.xlu0 %1140
        %v1142 = vsel %vm1099, %v1094, -inf
        %1143 = vmax.xlane.f32.xlu0 %v1142
        %v1144 = vpop.xlane.xlu0 %1143
        %v1145 = vsel %vm1099, %v1097, -inf
        %1146 = vmax.xlane.f32.xlu0 %v1145
        %v1147 = vpop.xlane.xlu0 %1146
        %v1148 = vsub.f32 %v849, %v1102
        %v1149 = vsub.f32 %v852, %v1105
        %v1150 = vsub.f32 %v884, %v1108
        %v1151 = vsub.f32 %v887, %v1111
        %v1152 = vsub.f32 %v919, %v1114
        %v1153 = vsub.f32 %v922, %v1117
        %v1154 = vsub.f32 %v954, %v1120
        %v1155 = vsub.f32 %v957, %v1123
        %v1156 = vsub.f32 %v989, %v1126
        %v1157 = vsub.f32 %v992, %v1129
        %v1158 = vsub.f32 %v1024, %v1132
        %v1159 = vsub.f32 %v1027, %v1135
        %v1160 = vsub.f32 %v1059, %v1138
        %v1161 = vsub.f32 %v1062, %v1141
        %v1162 = vsub.f32 %v1094, %v1144
        %v1163 = vsub.f32 %v1097, %v1147
        %v1164 = vmul.f32 %v1148, 1.442695
        %v1165 = vpow.pop %v1164
        %v1166 = vmul.f32 %v1149, 1.442695
        %v1167 = vpow.pop %v1166
        %v1168 = vmul.f32 %v1150, 1.442695
        %v1169 = vpow.pop %v1168
        %v1170 = vmul.f32 %v1151, 1.442695
        %v1171 = vpow.pop %v1170
        %v1172 = vmul.f32 %v1152, 1.442695
        %v1173 = vpow.pop %v1172
        %v1174 = vmul.f32 %v1153, 1.442695
        %v1175 = vpow.pop %v1174
        %v1176 = vmul.f32 %v1154, 1.442695
        %v1177 = vpow.pop %v1176
        %v1178 = vmul.f32 %v1155, 1.442695
        %v1179 = vpow.pop %v1178
        %v1180 = vmul.f32 %v1156, 1.442695
        %v1181 = vpow.pop %v1180
        %v1182 = vmul.f32 %v1157, 1.442695
        %v1183 = vpow.pop %v1182
        %v1184 = vmul.f32 %v1158, 1.442695
        %v1185 = vpow.pop %v1184
        %v1186 = vmul.f32 %v1159, 1.442695
        %v1187 = vpow.pop %v1186
        %v1188 = vmul.f32 %v1160, 1.442695
        %v1189 = vpow.pop %v1188
        %v1190 = vmul.f32 %v1161, 1.442695
        %v1191 = vpow.pop %v1190
        %v1192 = vmul.f32 %v1162, 1.442695
        %v1193 = vpow.pop %v1192
        %v1194 = vmul.f32 %v1163, 1.442695
        %v1195 = vpow.pop %v1194
        %v1196 = vsel %vm1099, %v1165, 0.0
        %1197 = vadd.xlane.f32.xlu0 %v1196
        %v1198 = vpop.xlane.xlu0 %1197
        %v1199 = vsel %vm1099, %v1167, 0.0
        %1200 = vadd.xlane.f32.xlu0 %v1199
        %v1201 = vpop.xlane.xlu0 %1200
        %v1202 = vsel %vm1099, %v1169, 0.0
        %1203 = vadd.xlane.f32.xlu0 %v1202
        %v1204 = vpop.xlane.xlu0 %1203
        %v1205 = vsel %vm1099, %v1171, 0.0
        %1206 = vadd.xlane.f32.xlu0 %v1205
        %v1207 = vpop.xlane.xlu0 %1206
        %v1208 = vsel %vm1099, %v1173, 0.0
        %1209 = vadd.xlane.f32.xlu0 %v1208
        %v1210 = vpop.xlane.xlu0 %1209
        %v1211 = vsel %vm1099, %v1175, 0.0
        %1212 = vadd.xlane.f32.xlu0 %v1211
        %v1213 = vpop.xlane.xlu0 %1212
        %v1214 = vsel %vm1099, %v1177, 0.0
        %1215 = vadd.xlane.f32.xlu0 %v1214
        %v1216 = vpop.xlane.xlu0 %1215
        %v1217 = vsel %vm1099, %v1179, 0.0
        %1218 = vadd.xlane.f32.xlu0 %v1217
        %v1219 = vpop.xlane.xlu0 %1218
        %v1220 = vsel %vm1099, %v1181, 0.0
        %1221 = vadd.xlane.f32.xlu0 %v1220
        %v1222 = vpop.xlane.xlu0 %1221
        %v1223 = vsel %vm1099, %v1183, 0.0
        %1224 = vadd.xlane.f32.xlu0 %v1223
        %v1225 = vpop.xlane.xlu0 %1224
        %v1226 = vsel %vm1099, %v1185, 0.0
        %1227 = vadd.xlane.f32.xlu0 %v1226
        %v1228 = vpop.xlane.xlu0 %1227
        %v1229 = vsel %vm1099, %v1187, 0.0
        %1230 = vadd.xlane.f32.xlu0 %v1229
        %v1231 = vpop.xlane.xlu0 %1230
        %v1232 = vsel %vm1099, %v1189, 0.0
        %1233 = vadd.xlane.f32.xlu0 %v1232
        %v1234 = vpop.xlane.xlu0 %1233
        %v1235 = vsel %vm1099, %v1191, 0.0
        %1236 = vadd.xlane.f32.xlu0 %v1235
        %v1237 = vpop.xlane.xlu0 %1236
        %v1238 = vsel %vm1099, %v1193, 0.0
        %1239 = vadd.xlane.f32.xlu0 %v1238
        %v1240 = vpop.xlane.xlu0 %1239
        %v1241 = vsel %vm1099, %v1195, 0.0
        %1242 = vadd.xlane.f32.xlu0 %v1241
        %v1243 = vpop.xlane.xlu0 %1242
        %v1244 = vrcp.pop %v1198
        %v1245 = vrcp.pop %v1201
        %v1246 = vrcp.pop %v1204
        %v1247 = vrcp.pop %v1207
        %v1248 = vrcp.pop %v1210
        %v1249 = vrcp.pop %v1213
        %v1250 = vrcp.pop %v1216
        %v1251 = vrcp.pop %v1219
        %v1252 = vrcp.pop %v1222
        %v1253 = vrcp.pop %v1225
        %v1254 = vrcp.pop %v1228
        %v1255 = vrcp.pop %v1231
        %v1256 = vrcp.pop %v1234
        %v1257 = vrcp.pop %v1237
        %v1258 = vrcp.pop %v1240
        %v1259 = vrcp.pop %v1243
        %v1260 = vmul.f32 %v1165, %v1244
        %v1261 = vmul.f32 %v1167, %v1245
        %v1262 = vmul.f32 %v1169, %v1246
        %v1263 = vmul.f32 %v1171, %v1247
        %v1264 = vmul.f32 %v1173, %v1248
        %v1265 = vmul.f32 %v1175, %v1249
        %v1266 = vmul.f32 %v1177, %v1250
        %v1267 = vmul.f32 %v1179, %v1251
        %v1268 = vmul.f32 %v1181, %v1252
        %v1269 = vmul.f32 %v1183, %v1253
        %v1270 = vmul.f32 %v1185, %v1254
        %v1271 = vmul.f32 %v1187, %v1255
        %v1272 = vmul.f32 %v1189, %v1256
        %v1273 = vmul.f32 %v1191, %v1257
        %v1274 = vmul.f32 %v1193, %v1258
        %v1275 = vmul.f32 %v1195, %v1259
        %1276 = vrot.lane.b32.xlu0 %v779, 64
        %v1277 = vpop.permute.xlu0 %1276
        %1278 = vrot.lane.b32.xlu0 %v782, 64
        %v1279 = vpop.permute.xlu0 %1278
        %v1283 = vsel %vm1099, %v1260, 0
        %v1286 = vsel %vm1099, %v1261, 0
        %1288 = vmatpush.msra.mxu0 0.0
        %1289 = vmatpush.msra.mxu0 0.0
        %1290 = vmatpush.msra.mxu0 0.0
        %1291 = vmatpush.msra.mxu0 0.0
        %1292 = vmatpush.msra.mxu0 0.0
        %1293 = vmatpush.msra.mxu0 0.0
        %1294 = vmatpush.msra.mxu0 0.0
        %1295 = vmatpush.msra.mxu0 0.0
        %1296 = vmatpush.msra.mxu0 0.0
        %1297 = vmatpush.msra.mxu0 0.0
        %1298 = vmatpush.msra.mxu0 0.0
        %1299 = vmatpush.msra.mxu0 0.0
        %1300 = vmatpush.msra.mxu0 0.0
        %1301 = vmatpush.msra.mxu0 0.0
        %1302 = vmatpush.msra.mxu0 %v1279
        %1303 = vmatpush.msra.mxu0 %v1277
        %1304 = vmatmul.f32.gmra.mxu0 %v1283
        %v1305 = vpop.f32.mrf.mxu0
        %v1306 = vadd.f32 0.0, %v1305
        %1307 = vmatmul.f32.gmra.mxu0 %v1286
        %v1308 = vpop.f32.mrf.mxu0
        %v1309 = vadd.f32 0.0, %v1308
        %1310 = vdwg.mxu0
        %1311 = vrot.lane.b32.xlu0 %v785, 64
        %v1312 = vpop.permute.xlu0 %1311
        %1313 = vrot.lane.b32.xlu0 %v788, 64
        %v1314 = vpop.permute.xlu0 %1313
        %v1318 = vsel %vm1099, %v1262, 0
        %v1321 = vsel %vm1099, %v1263, 0
        %1323 = vmatpush.msra.mxu0 0.0
        %1324 = vmatpush.msra.mxu0 0.0
        %1325 = vmatpush.msra.mxu0 0.0
        %1326 = vmatpush.msra.mxu0 0.0
        %1327 = vmatpush.msra.mxu0 0.0
        %1328 = vmatpush.msra.mxu0 0.0
        %1329 = vmatpush.msra.mxu0 0.0
        %1330 = vmatpush.msra.mxu0 0.0
        %1331 = vmatpush.msra.mxu0 0.0
        %1332 = vmatpush.msra.mxu0 0.0
        %1333 = vmatpush.msra.mxu0 0.0
        %1334 = vmatpush.msra.mxu0 0.0
        %1335 = vmatpush.msra.mxu0 0.0
        %1336 = vmatpush.msra.mxu0 0.0
        %1337 = vmatpush.msra.mxu0 %v1314
        %1338 = vmatpush.msra.mxu0 %v1312
        %1339 = vmatmul.f32.gmra.mxu0 %v1318
        %v1340 = vpop.f32.mrf.mxu0
        %v1341 = vadd.f32 0.0, %v1340
        %1342 = vmatmul.f32.gmra.mxu0 %v1321
        %v1343 = vpop.f32.mrf.mxu0
        %v1344 = vadd.f32 0.0, %v1343
        %1345 = vdwg.mxu0
        %1346 = vrot.lane.b32.xlu0 %v795, 64
        %v1347 = vpop.permute.xlu0 %1346
        %1348 = vrot.lane.b32.xlu0 %v797, 64
        %v1349 = vpop.permute.xlu0 %1348
        %v1353 = vsel %vm1099, %v1264, 0
        %v1356 = vsel %vm1099, %v1265, 0
        %1358 = vmatpush.msra.mxu0 0.0
        %1359 = vmatpush.msra.mxu0 0.0
        %1360 = vmatpush.msra.mxu0 0.0
        %1361 = vmatpush.msra.mxu0 0.0
        %1362 = vmatpush.msra.mxu0 0.0
        %1363 = vmatpush.msra.mxu0 0.0
        %1364 = vmatpush.msra.mxu0 0.0
        %1365 = vmatpush.msra.mxu0 0.0
        %1366 = vmatpush.msra.mxu0 0.0
        %1367 = vmatpush.msra.mxu0 0.0
        %1368 = vmatpush.msra.mxu0 0.0
        %1369 = vmatpush.msra.mxu0 0.0
        %1370 = vmatpush.msra.mxu0 0.0
        %1371 = vmatpush.msra.mxu0 0.0
        %1372 = vmatpush.msra.mxu0 %v1349
        %1373 = vmatpush.msra.mxu0 %v1347
        %1374 = vmatmul.f32.gmra.mxu0 %v1353
        %v1375 = vpop.f32.mrf.mxu0
        %v1376 = vadd.f32 0.0, %v1375
        %1377 = vmatmul.f32.gmra.mxu0 %v1356
        %v1378 = vpop.f32.mrf.mxu0
        %v1379 = vadd.f32 0.0, %v1378
        %1380 = vdwg.mxu0
        %1381 = vrot.lane.b32.xlu0 %v799, 64
        %v1382 = vpop.permute.xlu0 %1381
        %1383 = vrot.lane.b32.xlu0 %v801, 64
        %v1384 = vpop.permute.xlu0 %1383
        %v1388 = vsel %vm1099, %v1266, 0
        %v1391 = vsel %vm1099, %v1267, 0
        %1393 = vmatpush.msra.mxu0 0.0
        %1394 = vmatpush.msra.mxu0 0.0
        %1395 = vmatpush.msra.mxu0 0.0
        %1396 = vmatpush.msra.mxu0 0.0
        %1397 = vmatpush.msra.mxu0 0.0
        %1398 = vmatpush.msra.mxu0 0.0
        %1399 = vmatpush.msra.mxu0 0.0
        %1400 = vmatpush.msra.mxu0 0.0
        %1401 = vmatpush.msra.mxu0 0.0
        %1402 = vmatpush.msra.mxu0 0.0
        %1403 = vmatpush.msra.mxu0 0.0
        %1404 = vmatpush.msra.mxu0 0.0
        %1405 = vmatpush.msra.mxu0 0.0
        %1406 = vmatpush.msra.mxu0 0.0
        %1407 = vmatpush.msra.mxu0 %v1384
        %1408 = vmatpush.msra.mxu0 %v1382
        %1409 = vmatmul.f32.gmra.mxu0 %v1388
        %v1410 = vpop.f32.mrf.mxu0
        %v1411 = vadd.f32 0.0, %v1410
        %1412 = vmatmul.f32.gmra.mxu0 %v1391
        %v1413 = vpop.f32.mrf.mxu0
        %v1414 = vadd.f32 0.0, %v1413
        %1415 = vdwg.mxu0
        %1416 = vrot.lane.b32.xlu0 %v803, 64
        %v1417 = vpop.permute.xlu0 %1416
        %1418 = vrot.lane.b32.xlu0 %v805, 64
        %v1419 = vpop.permute.xlu0 %1418
        %v1423 = vsel %vm1099, %v1268, 0
        %v1426 = vsel %vm1099, %v1269, 0
        %1428 = vmatpush.msra.mxu0 0.0
        %1429 = vmatpush.msra.mxu0 0.0
        %1430 = vmatpush.msra.mxu0 0.0
        %1431 = vmatpush.msra.mxu0 0.0
        %1432 = vmatpush.msra.mxu0 0.0
        %1433 = vmatpush.msra.mxu0 0.0
        %1434 = vmatpush.msra.mxu0 0.0
        %1435 = vmatpush.msra.mxu0 0.0
        %1436 = vmatpush.msra.mxu0 0.0
        %1437 = vmatpush.msra.mxu0 0.0
        %1438 = vmatpush.msra.mxu0 0.0
        %1439 = vmatpush.msra.mxu0 0.0
        %1440 = vmatpush.msra.mxu0 0.0
        %1441 = vmatpush.msra.mxu0 0.0
        %1442 = vmatpush.msra.mxu0 %v1419
        %1443 = vmatpush.msra.mxu0 %v1417
        %1444 = vmatmul.f32.gmra.mxu0 %v1423
        %v1445 = vpop.f32.mrf.mxu0
        %v1446 = vadd.f32 0.0, %v1445
        %1447 = vmatmul.f32.gmra.mxu0 %v1426
        %v1448 = vpop.f32.mrf.mxu0
        %v1449 = vadd.f32 0.0, %v1448
        %1450 = vdwg.mxu0
        %1451 = vrot.lane.b32.xlu0 %v807, 64
        %v1452 = vpop.permute.xlu0 %1451
        %1453 = vrot.lane.b32.xlu0 %v809, 64
        %v1454 = vpop.permute.xlu0 %1453
        %v1458 = vsel %vm1099, %v1270, 0
        %v1461 = vsel %vm1099, %v1271, 0
        %1463 = vmatpush.msra.mxu0 0.0
        %1464 = vmatpush.msra.mxu0 0.0
        %1465 = vmatpush.msra.mxu0 0.0
        %1466 = vmatpush.msra.mxu0 0.0
        %1467 = vmatpush.msra.mxu0 0.0
        %1468 = vmatpush.msra.mxu0 0.0
        %1469 = vmatpush.msra.mxu0 0.0
        %1470 = vmatpush.msra.mxu0 0.0
        %1471 = vmatpush.msra.mxu0 0.0
        %1472 = vmatpush.msra.mxu0 0.0
        %1473 = vmatpush.msra.mxu0 0.0
        %1474 = vmatpush.msra.mxu0 0.0
        %1475 = vmatpush.msra.mxu0 0.0
        %1476 = vmatpush.msra.mxu0 0.0
        %1477 = vmatpush.msra.mxu0 %v1454
        %1478 = vmatpush.msra.mxu0 %v1452
        %1479 = vmatmul.f32.gmra.mxu0 %v1458
        %v1480 = vpop.f32.mrf.mxu0
        %v1481 = vadd.f32 0.0, %v1480
        %1482 = vmatmul.f32.gmra.mxu0 %v1461
        %v1483 = vpop.f32.mrf.mxu0
        %v1484 = vadd.f32 0.0, %v1483
        %1485 = vdwg.mxu0
        %1486 = vrot.lane.b32.xlu0 %v811, 64
        %v1487 = vpop.permute.xlu0 %1486
        %1488 = vrot.lane.b32.xlu0 %v813, 64
        %v1489 = vpop.permute.xlu0 %1488
        %v1493 = vsel %vm1099, %v1272, 0
        %v1496 = vsel %vm1099, %v1273, 0
        %1498 = vmatpush.msra.mxu0 0.0
        %1499 = vmatpush.msra.mxu0 0.0
        %1500 = vmatpush.msra.mxu0 0.0
        %1501 = vmatpush.msra.mxu0 0.0
        %1502 = vmatpush.msra.mxu0 0.0
        %1503 = vmatpush.msra.mxu0 0.0
        %1504 = vmatpush.msra.mxu0 0.0
        %1505 = vmatpush.msra.mxu0 0.0
        %1506 = vmatpush.msra.mxu0 0.0
        %1507 = vmatpush.msra.mxu0 0.0
        %1508 = vmatpush.msra.mxu0 0.0
        %1509 = vmatpush.msra.mxu0 0.0
        %1510 = vmatpush.msra.mxu0 0.0
        %1511 = vmatpush.msra.mxu0 0.0
        %1512 = vmatpush.msra.mxu0 %v1489
        %1513 = vmatpush.msra.mxu0 %v1487
        %1514 = vmatmul.f32.gmra.mxu0 %v1493
        %v1515 = vpop.f32.mrf.mxu0
        %v1516 = vadd.f32 0.0, %v1515
        %1517 = vmatmul.f32.gmra.mxu0 %v1496
        %v1518 = vpop.f32.mrf.mxu0
        %v1519 = vadd.f32 0.0, %v1518
        %1520 = vdwg.mxu0
        %1521 = vrot.lane.b32.xlu0 %v815, 64
        %v1522 = vpop.permute.xlu0 %1521
        %1523 = vrot.lane.b32.xlu0 %v817, 64
        %v1524 = vpop.permute.xlu0 %1523
        %v1528 = vsel %vm1099, %v1274, 0
        %v1531 = vsel %vm1099, %v1275, 0
        %1533 = vmatpush.msra.mxu0 0.0
        %1534 = vmatpush.msra.mxu0 0.0
        %1535 = vmatpush.msra.mxu0 0.0
        %1536 = vmatpush.msra.mxu0 0.0
        %1537 = vmatpush.msra.mxu0 0.0
        %1538 = vmatpush.msra.mxu0 0.0
        %1539 = vmatpush.msra.mxu0 0.0
        %1540 = vmatpush.msra.mxu0 0.0
        %1541 = vmatpush.msra.mxu0 0.0
        %1542 = vmatpush.msra.mxu0 0.0
        %1543 = vmatpush.msra.mxu0 0.0
        %1544 = vmatpush.msra.mxu0 0.0
        %1545 = vmatpush.msra.mxu0 0.0
        %1546 = vmatpush.msra.mxu0 0.0
        %1547 = vmatpush.msra.mxu0 %v1524
        %1548 = vmatpush.msra.mxu0 %v1522
        %1549 = vmatmul.f32.gmra.mxu0 %v1528
        %v1550 = vpop.f32.mrf.mxu0
        %v1551 = vadd.f32 0.0, %v1550
        %1552 = vmatmul.f32.gmra.mxu0 %v1531
        %v1553 = vpop.f32.mrf.mxu0
        %v1554 = vadd.f32 0.0, %v1553
        %1555 = vdwg.mxu0
        %1560 = vrot.lane.b32.xlu0 %v1376, 8
        %v1561 = vpop.permute.xlu0 %1560
        %1562 = vrot.lane.b32.xlu0 %v1379, 8
        %v1563 = vpop.permute.xlu0 %1562
        %1564 = vrot.lane.b32.xlu0 %v1411, 8
        %v1565 = vpop.permute.xlu0 %1564
        %1566 = vrot.lane.b32.xlu0 %v1414, 8
        %v1567 = vpop.permute.xlu0 %1566
        %1576 = vrot.lane.b32.xlu0 %v1446, 16
        %v1577 = vpop.permute.xlu0 %1576
        %1578 = vrot.lane.b32.xlu0 %v1449, 16
        %v1579 = vpop.permute.xlu0 %1578
        %1580 = vrot.lane.b32.xlu0 %v1481, 16
        %v1581 = vpop.permute.xlu0 %1580
        %1582 = vrot.lane.b32.xlu0 %v1484, 16
        %v1583 = vpop.permute.xlu0 %1582
        %1592 = vrot.lane.b32.xlu0 %v1516, 24
        %v1593 = vpop.permute.xlu0 %1592
        %1594 = vrot.lane.b32.xlu0 %v1519, 24
        %v1595 = vpop.permute.xlu0 %1594
        %1596 = vrot.lane.b32.xlu0 %v1551, 24
        %v1597 = vpop.permute.xlu0 %1596
        %1598 = vrot.lane.b32.xlu0 %v1554, 24
        %v1599 = vpop.permute.xlu0 %1598
        %v1604 = vsel %vm822, %v1306, %v1561
        %v1605 = vsel %vm822, %v1309, %v1563
        %v1606 = vsel %vm822, %v1341, %v1565
        %v1607 = vsel %vm822, %v1344, %v1567
        %v1608 = vsel %vm1099, %v1604, %v1577
        %v1609 = vsel %vm1099, %v1605, %v1579
        %v1610 = vsel %vm1099, %v1606, %v1581
        %v1611 = vsel %vm1099, %v1607, %v1583
        %vm1612 = vcmask 195584
        %v1613 = vsel %vm1612, %v1608, %v1593
        %v1614 = vsel %vm1612, %v1609, %v1595
        %v1615 = vsel %vm1612, %v1610, %v1597
        %v1616 = vsel %vm1612, %v1611, %v1599
        %v1617 = vld [vmem:[%s545] sm:$0xff]
        %v1618 = vld [vmem:[%s545 + $0x8] sm:$0xff]
        %v1619 = vld [vmem:[%s545 + $0x10] sm:$0xff]
        %v1620 = vld [vmem:[%s545 + $0x18] sm:$0xff]
        %v1621 = vld [vmem:[%s607] sm:$0x1]
        %v1623 = vperm.slane %v1621, 0
        %v1626 = vsel %vm629, %v1613, 0
        %v1629 = vsel %vm629, %v1614, 0
        %v1632 = vsel %vm629, %v1615, 0
        %v1635 = vsel %vm629, %v1616, 0
        %1637 = vmatpush.msra.mxu0 0.0
        %1638 = vmatpush.msra.mxu0 0.0
        %1639 = vmatpush.msra.mxu0 0.0
        %1640 = vmatpush.msra.mxu0 0.0
        %1641 = vmatpush.msra.mxu0 0.0
        %1642 = vmatpush.msra.mxu0 0.0
        %1643 = vmatpush.msra.mxu0 0.0
        %1644 = vmatpush.msra.mxu0 0.0
        %1645 = vmatpush.msra.mxu0 0.0
        %1646 = vmatpush.msra.mxu0 0.0
        %1647 = vmatpush.msra.mxu0 0.0
        %1648 = vmatpush.msra.mxu0 0.0
        %1649 = vmatpush.msra.mxu0 %v1620
        %1650 = vmatpush.msra.mxu0 %v1619
        %1651 = vmatpush.msra.mxu0 %v1618
        %1652 = vmatpush.msra.mxu0 %v1617
        %1653 = vmatmul.f32.gmra.mxu0 %v1626
        %v1654 = vpop.f32.mrf.mxu0
        %v1655 = vadd.f32 %v1623, %v1654
        %1656 = vmatmul.f32.gmra.mxu0 %v1629
        %v1657 = vpop.f32.mrf.mxu0
        %v1658 = vadd.f32 %v1623, %v1657
        %1659 = vmatmul.f32.gmra.mxu0 %v1632
        %v1660 = vpop.f32.mrf.mxu0
        %v1661 = vadd.f32 %v1623, %v1660
        %1662 = vmatmul.f32.gmra.mxu0 %v1635
        %v1663 = vpop.f32.mrf.mxu0
        %v1664 = vadd.f32 %v1623, %v1663
        %1665 = vdwg.mxu0
        %v1666 = vadd.f32 %v625, %v1655
        %v1667 = vadd.f32 %v626, %v1658
        %v1668 = vadd.f32 %v627, %v1661
        %v1669 = vadd.f32 %v628, %v1664
        %p1670 = scmp.lt.s32.totalorder %s39, 1
        // Predicated region
        $region81: #{tpu_custom_call.1} parent=55 // pred_check
          %p1671 = pneg %p1670
        $region82: #{tpu_custom_call.1} parent=55 // pred_check_branch
          %1673 = sbr.rel (%p1671) target = $region84
        $region83: #{tpu_custom_call.1} parent=55 // pred_region
          %1674 = vst.msk [vmem:[#allocation11] sm:$0xff] %vm629, %v1666
          %1675 = vst.msk [vmem:[#allocation11 + $0x8] sm:$0xff] %vm629, %v1667
          %1676 = vst.msk [vmem:[#allocation11 + $0x10] sm:$0xff] %vm629, %v1668
          %1677 = vst.msk [vmem:[#allocation11 + $0x18] sm:$0xff] %vm629, %v1669
        $region84: #{tpu_custom_call.1} parent=55 // pred_fallthru
          _
        %p1678 = scmp.eq.s32.totalorder %s39, 1
        // Predicated region
        $region85: #{tpu_custom_call.1} parent=55 // pred_check
          %p1679 = pneg %p1678
        $region86: #{tpu_custom_call.1} parent=55 // pred_check_branch
          %1681 = sbr.rel (%p1679) target = $region88
        $region87: #{tpu_custom_call.1} parent=55 // pred_region
          %v1682 = vsel %vm629, %v1666, 0.0
          %1683 = vadd.xlane.f32.xlu0 %v1682
          %v1684 = vpop.xlane.xlu0 %1683
          %v1685 = vsel %vm629, %v1667, 0.0
          %1686 = vadd.xlane.f32.xlu0 %v1685
          %v1687 = vpop.xlane.xlu0 %1686
          %v1688 = vsel %vm629, %v1668, 0.0
          %1689 = vadd.xlane.f32.xlu0 %v1688
          %v1690 = vpop.xlane.xlu0 %1689
          %v1691 = vsel %vm629, %v1669, 0.0
          %1692 = vadd.xlane.f32.xlu0 %v1691
          %v1693 = vpop.xlane.xlu0 %1692
          %v1694 = vmul.f32 %v1684, %v648
          %v1695 = vmul.f32 %v1687, %v648
          %v1696 = vmul.f32 %v1690, %v648
          %v1697 = vmul.f32 %v1693, %v648
          %v1698 = vsub.f32 %v1666, %v1694
          %v1699 = vsub.f32 %v1667, %v1695
          %v1700 = vsub.f32 %v1668, %v1696
          %v1701 = vsub.f32 %v1669, %v1697
          %v1702 = vmul.f32 %v1698, %v1698
          %v1703 = vmul.f32 %v1699, %v1699
          %v1704 = vmul.f32 %v1700, %v1700
          %v1705 = vmul.f32 %v1701, %v1701
          %v1706 = vsel %vm629, %v1702, 0.0
          %1707 = vadd.xlane.f32.xlu0 %v1706
          %v1708 = vpop.xlane.xlu0 %1707
          %v1709 = vsel %vm629, %v1703, 0.0
          %1710 = vadd.xlane.f32.xlu0 %v1709
          %v1711 = vpop.xlane.xlu0 %1710
          %v1712 = vsel %vm629, %v1704, 0.0
          %1713 = vadd.xlane.f32.xlu0 %v1712
          %v1714 = vpop.xlane.xlu0 %1713
          %v1715 = vsel %vm629, %v1705, 0.0
          %1716 = vadd.xlane.f32.xlu0 %v1715
          %v1717 = vpop.xlane.xlu0 %1716
          %v1718 = vmul.f32 %v1708, %v648
          %v1719 = vmul.f32 %v1711, %v648
          %v1720 = vmul.f32 %v1714, %v648
          %v1721 = vmul.f32 %v1717, %v648
          %v1722 = vadd.f32 %v1718, 1e-05
          %v1723 = vadd.f32 %v1719, 1e-05
          %v1724 = vadd.f32 %v1720, 1e-05
          %v1725 = vadd.f32 %v1721, 1e-05
          %v1726 = vrsqrt.pop %v1722
          %v1727 = vmul.f32 %v1726, %v1722
          %v1728 = vmul.f32 %v1727, %v1726
          %v1729 = vmul.f32 0.5, %v1728
          %v1730 = vsub.f32 1.5, %v1729
          %v1731 = vmul.f32 %v1726, %v1730
          %vm1732 = vweird.f32 %v1722
          %vm1733 = vweird.f32 %v1726
          %vm1734 = vmor %vm1732, %vm1733
          %v1735 = vsel %vm1734, %v1726, %v1731
          %v1736 = vrsqrt.pop %v1723
          %v1737 = vmul.f32 %v1736, %v1723
          %v1738 = vmul.f32 %v1737, %v1736
          %v1739 = vmul.f32 0.5, %v1738
          %v1740 = vsub.f32 1.5, %v1739
          %v1741 = vmul.f32 %v1736, %v1740
          %vm1742 = vweird.f32 %v1723
          %vm1743 = vweird.f32 %v1736
          %vm1744 = vmor %vm1742, %vm1743
          %v1745 = vsel %vm1744, %v1736, %v1741
          %v1746 = vrsqrt.pop %v1724
          %v1747 = vmul.f32 %v1746, %v1724
          %v1748 = vmul.f32 %v1747, %v1746
          %v1749 = vmul.f32 0.5, %v1748
          %v1750 = vsub.f32 1.5, %v1749
          %v1751 = vmul.f32 %v1746, %v1750
          %vm1752 = vweird.f32 %v1724
          %vm1753 = vweird.f32 %v1746
          %vm1754 = vmor %vm1752, %vm1753
          %v1755 = vsel %vm1754, %v1746, %v1751
          %v1756 = vrsqrt.pop %v1725
          %v1757 = vmul.f32 %v1756, %v1725
          %v1758 = vmul.f32 %v1757, %v1756
          %v1759 = vmul.f32 0.5, %v1758
          %v1760 = vsub.f32 1.5, %v1759
          %v1761 = vmul.f32 %v1756, %v1760
          %vm1762 = vweird.f32 %v1725
          %vm1763 = vweird.f32 %v1756
          %vm1764 = vmor %vm1762, %vm1763
          %v1765 = vsel %vm1764, %v1756, %v1761
          %v1766 = vmul.f32 %v1698, %v1735
          %v1767 = vmul.f32 %v1699, %v1745
          %v1768 = vmul.f32 %v1700, %v1755
          %v1769 = vmul.f32 %v1701, %v1765
          %v1770 = vld [vmem:[%s7] sm:$0x1]
          %v1772 = vperm.slane %v1770, 0
          %v1774 = vmul.f32 %v1766, %v1772
          %v1775 = vmul.f32 %v1767, %v1772
          %v1776 = vmul.f32 %v1768, %v1772
          %v1777 = vmul.f32 %v1769, %v1772
          %v1778 = vld [vmem:[%s8] sm:$0x1]
          %v1780 = vperm.slane %v1778, 0
          %v1782 = vadd.f32 %v1774, %v1780
          %v1783 = vadd.f32 %v1775, %v1780
          %v1784 = vadd.f32 %v1776, %v1780
          %v1785 = vadd.f32 %v1777, %v1780
          %1786 = vst.msk [vmem:[#allocation11] sm:$0xff] %vm629, %v1782
          %1787 = vst.msk [vmem:[#allocation11 + $0x8] sm:$0xff] %vm629, %v1783
          %1788 = vst.msk [vmem:[#allocation11 + $0x10] sm:$0xff] %vm629, %v1784
          %1789 = vst.msk [vmem:[#allocation11 + $0x18] sm:$0xff] %vm629, %v1785
          %v1790 = vmul.f32 %v779, 2.828427
          %v1791 = vmul.f32 %v782, 2.828427
          %v1792 = vmul.f32 %v785, 2.828427
          %v1793 = vmul.f32 %v788, 2.828427
          %1794 = vst.msk [vmem:[#allocation12] sm:$0xff] %vm629, %v1790
          %1795 = vst.msk [vmem:[#allocation12 + $0x8] sm:$0xff] %vm629, %v1791
          %1796 = vst.msk [vmem:[#allocation12 + $0x10] sm:$0xff] %vm629, %v1792
          %1797 = vst.msk [vmem:[#allocation12 + $0x18] sm:$0xff] %vm629, %v1793
          %1802 = vst.msk [vmem:[#allocation14] sm:$0xff] %vm629, %v819
          %1803 = vst.msk [vmem:[#allocation14 + $0x8] sm:$0xff] %vm629, %v821
          %1804 = vst.msk [vmem:[#allocation14 + $0x10] sm:$0xff] %vm629, %v855
          %1805 = vst.msk [vmem:[#allocation14 + $0x18] sm:$0xff] %vm629, %v857
          %1806 = vst.msk [vmem:[#allocation15] sm:$0xff] %vm629, %v1277
          %1807 = vst.msk [vmem:[#allocation15 + $0x8] sm:$0xff] %vm629, %v1279
          %1808 = vst.msk [vmem:[#allocation15 + $0x10] sm:$0xff] %vm629, %v1312
          %1809 = vst.msk [vmem:[#allocation15 + $0x18] sm:$0xff] %vm629, %v1314
        $region88: #{tpu_custom_call.1} parent=55 // pred_fallthru
          _
        // Predicated region
        $region89: #{tpu_custom_call.1} parent=55 // pred_check
          %p1810 = pneg %p288
        $region90: #{tpu_custom_call.1} parent=55 // pred_check_branch
          %1812 = sbr.rel (%p1810) target = $region92
        $region91: #{tpu_custom_call.1} parent=55 // pred_region
          %s1813 = smul.u32 4, %s38
          %1815 = vsyncadd [#allocation4], 0
          %s1816 = smul.addr %s1813, 8
          %s1817 = scalar_lea.hbm %s9, %s1816
          %s1818 = sshll.u32 [#allocation11], 4
          %s1819 = int_to_ptr.vmem [resolvable:$true] %s1818
          %s1820 = sshll.u32 %s1817, 4
          %s1821 = int_to_ptr.hbm [resolvable:$true] %s1820
          %1826 = dma.vmem_to_hbm [thread:$0]  %s1819, 512, %s1821, [#allocation4], 128, 128, 8
        $region92: #{tpu_custom_call.1} parent=55 // pred_fallthru
          _
        // Predicated region
        $region93: #{tpu_custom_call.1} parent=55 // pred_check
          %p1827 = pneg %p314
        $region94: #{tpu_custom_call.1} parent=55 // pred_check_branch
          %1829 = sbr.rel (%p1827) target = $region96
        $region95: #{tpu_custom_call.1} parent=55 // pred_region
          %s1830 = smul.u32 4, %s38
          %1832 = vsyncadd [#allocation13], 0
          %s1833 = smul.addr %s1830, 8
          %s1834 = scalar_lea.hbm %s10, %s1833
          %s1835 = sshll.u32 [#allocation12], 4
          %s1836 = int_to_ptr.vmem [resolvable:$true] %s1835
          %s1837 = sshll.u32 %s1834, 4
          %s1838 = int_to_ptr.hbm [resolvable:$true] %s1837
          %1843 = dma.vmem_to_hbm [thread:$0]  %s1836, 512, %s1838, [#allocation13], 128, 128, 8
        $region96: #{tpu_custom_call.1} parent=55 // pred_fallthru
          _
        // Predicated region
        $region97: #{tpu_custom_call.1} parent=55 // pred_check
          %p1844 = pneg %p340
        $region98: #{tpu_custom_call.1} parent=55 // pred_check_branch
          %1846 = sbr.rel (%p1844) target = $region100
        $region99: #{tpu_custom_call.1} parent=55 // pred_region
          %s1847 = smul.u32 4, %s38
          %1849 = vsyncadd [#allocation13], 0
          %s1850 = smul.addr %s1847, 8
          %s1851 = scalar_lea.hbm %s11, %s1850
          %s1852 = sshll.u32 [#allocation14], 4
          %s1853 = int_to_ptr.vmem [resolvable:$true] %s1852
          %s1854 = sshll.u32 %s1851, 4
          %s1855 = int_to_ptr.hbm [resolvable:$true] %s1854
          %1860 = dma.vmem_to_hbm [thread:$0]  %s1853, 512, %s1855, [#allocation13], 128, 128, 8
        $region100: #{tpu_custom_call.1} parent=55 // pred_fallthru
          _
        // Predicated region
        $region101: #{tpu_custom_call.1} parent=55 // pred_check
          %p1861 = pneg %p366
        $region102: #{tpu_custom_call.1} parent=55 // pred_check_branch
          %1863 = sbr.rel (%p1861) target = $region104
        $region103: #{tpu_custom_call.1} parent=55 // pred_region
          %s1864 = smul.u32 4, %s38
          %1866 = vsyncadd [#allocation16], 0
          %s1867 = smul.addr %s1864, 8
          %s1868 = scalar_lea.hbm %s12, %s1867
          %s1869 = sshll.u32 [#allocation15], 4
          %s1870 = int_to_ptr.vmem [resolvable:$true] %s1869
          %s1871 = sshll.u32 %s1868, 4
          %s1872 = int_to_ptr.hbm [resolvable:$true] %s1871
          %1877 = dma.vmem_to_hbm [thread:$0]  %s1870, 512, %s1872, [#allocation16], 128, 128, 8
        $region104: #{tpu_custom_call.1} parent=55 // pred_fallthru
          _
        // Predicated region
        $region105: #{tpu_custom_call.1} parent=55 // pred_check
          %p1878 = pneg %p288
        $region106: #{tpu_custom_call.1} parent=55 // pred_check_branch
          %1880 = sbr.rel (%p1878) target = $region108
        $region107: #{tpu_custom_call.1} parent=55 // pred_region
          %1882 = dma.done [#allocation4], 512
        $region108: #{tpu_custom_call.1} parent=55 // pred_fallthru
          _
        // Predicated region
        $region109: #{tpu_custom_call.1} parent=55 // pred_check
          %p1883 = pneg %p314
        $region110: #{tpu_custom_call.1} parent=55 // pred_check_branch
          %1885 = sbr.rel (%p1883) target = $region112
        $region111: #{tpu_custom_call.1} parent=55 // pred_region
          %1887 = dma.done [#allocation13], 512
        $region112: #{tpu_custom_call.1} parent=55 // pred_fallthru
          _
        // Predicated region
        $region113: #{tpu_custom_call.1} parent=55 // pred_check
          %p1888 = pneg %p340
        $region114: #{tpu_custom_call.1} parent=55 // pred_check_branch
          %1890 = sbr.rel (%p1888) target = $region116
        $region115: #{tpu_custom_call.1} parent=55 // pred_region
          %1892 = dma.done [#allocation13], 512
        $region116: #{tpu_custom_call.1} parent=55 // pred_fallthru
          _
        // Predicated region
        $region117: #{tpu_custom_call.1} parent=55 // pred_check
          %p1893 = pneg %p366
        $region118: #{tpu_custom_call.1} parent=55 // pred_check_branch
          %1895 = sbr.rel (%p1893) target = $region120
        $region119: #{tpu_custom_call.1} parent=55 // pred_region
          %1897 = dma.done [#allocation16], 512
        $region120: #{tpu_custom_call.1} parent=55 // pred_fallthru
          _
      $region56: #{tpu_custom_call.1} parent=5 // pred_fallthru
        _
      %p1898 = scmp.le.s32.totalorder 2, %s29
      // Predicated region
      $region121: #{tpu_custom_call.1} parent=5 // pred_check
        %p1899 = pneg %p1898
      $region122: #{tpu_custom_call.1} parent=5 // pred_check_branch
        %1901 = sbr.rel (%p1899) target = $region124
      $region123: #{tpu_custom_call.1} parent=5 // pred_region
        %s1902 = ssub.s32 %s29, 2
      $region124: #{tpu_custom_call.1} parent=5 // pred_fallthru
        _
    $region6: #{tpu_custom_call.1} parent=1 // loop_footer
      %s33 = sadd.s32 1, %s29
    $region7: #{tpu_custom_call.1} parent=1 // loop_footer_branch
      %28 = sbr.rel target = $region3
    $region8: #{tpu_custom_call.1} parent=1 // loop_exit
      _
    %1903 = vsyncpa [#allocation3], 1
    %s1904 = scalar_lea.sflag [#allocation3], 1
    %1905 = vsyncpa %s1904, 1
    %1906 = vsyncpa [#allocation6], 1
    %s1907 = scalar_lea.sflag [#allocation6], 1
    %1908 = vsyncpa %s1907, 1
    %1909 = vsyncpa [#allocation9], 1
    %s1910 = scalar_lea.sflag [#allocation9], 1
    %1911 = vsyncpa %s1910, 1
    %1912 = vsyncpa [#allocation4], 1
    %s1913 = scalar_lea.sflag [#allocation4], 1
    %1914 = vsyncpa %s1913, 1
    %1915 = vsyncpa [#allocation13], 1
    %1916 = vsyncpa [#allocation16], 1

</llo_original>
